<compile_context>
chip_gen: v7x
topology: tpu7x:2x2x1
jax: 0.10.0
libtpu: 0.0.40
codegen_flags: <defaults>
</compile_context>

<pallas_src>
import numpy as np
import jax
import jax.numpy as jnp
from jax.experimental import pallas as pl
from jax.experimental.pallas import tpu as pltpu

EPS = 1e-5


# ----------------------------------------------------------------------------
# Kernel bodies (all work on per-sample (C, L) tiles, channels on sublanes,
# length on lanes).
# ----------------------------------------------------------------------------
def _bn_conv3_res_relu(v_in, scale, shift, w3cat_t, b3):
    """relu(Conv1d_k3(BN(v_in)) + v_in) for one sample; v_in is (C, L)."""
    L = v_in.shape[1]
    v = v_in * scale + shift                               # folded BatchNorm (one FMA)

    # halo columns (zero padding=1), single small (1, L) iota reused for both masks
    lane = jax.lax.broadcasted_iota(jnp.int32, (1, L), 1)
    v_prev = jnp.where(lane == 0, 0.0, pltpu.roll(v, shift=1, axis=1))       # v[:, l-1]
    v_next = jnp.where(lane == L - 1, 0.0, pltpu.roll(v, shift=L - 1, axis=1))  # v[:, l+1]

    vcat = jnp.concatenate([v_prev, v, v_next], axis=0)    # (3C, L), sublane concat
    y = jnp.dot(w3cat_t, vcat, preferred_element_type=jnp.float32) + b3      # one MXU dot
    return jnp.maximum(y + v_in, 0.0)


def _stem_stats_kernel(x_ref, w1t_ref, b1_ref, sum_ref, sq_ref):
    """Pass 1: conv1x1 + per-sample per-channel sum / sumsq (for BN1 stats)."""
    h0 = jnp.dot(w1t_ref[...], x_ref[...],
                 preferred_element_type=jnp.float32) + b1_ref[...]           # (Cout, L)
    sum_ref[...] = jnp.sum(h0, axis=1, keepdims=True)
    sq_ref[...] = jnp.sum(h0 * h0, axis=1, keepdims=True)


def _res_unit1_kernel(x_ref, w1t_ref, b1_ref, scale_ref, shift_ref,
                      w3cat_t_ref, b3_ref, h1_ref, sum_ref, sq_ref):
    """Pass 2: recompute conv1x1, apply res_unit1, emit h1 + stats for BN2."""
    h0 = jnp.dot(w1t_ref[...], x_ref[...],
                 preferred_element_type=jnp.float32) + b1_ref[...]           # (Cout, L)
    h1 = _bn_conv3_res_relu(h0, scale_ref[...], shift_ref[...],
                            w3cat_t_ref[...], b3_ref[...])
    h1_ref[...] = h1
    sum_ref[...] = jnp.sum(h1, axis=1, keepdims=True)
    sq_ref[...] = jnp.sum(h1 * h1, axis=1, keepdims=True)


def _res_unit2_pool_kernel(h1_ref, scale_ref, shift_ref, w3cat_t_ref, b3_ref,
                           sel_ref, o_ref):
    """Pass 3: res_unit2 + MaxPool1d(kernel=2)."""
    h1 = h1_ref[...]                                                         # (Cout, L)
    h2 = _bn_conv3_res_relu(h1, scale_ref[...], shift_ref[...],
                            w3cat_t_ref[...], b3_ref[...])
    L = h2.shape[1]
    # m[:, 2j] = max(h2[:, 2j], h2[:, 2j+1]); wrap at the last (odd) column is
    # never selected, so no boundary mask is needed.
    m = jnp.maximum(h2, pltpu.roll(h2, shift=L - 1, axis=1))
    # exact 0/1 selection of even columns -> (Cout, L//2), avoids lane-split reshape
    o_ref[...] = jnp.dot(m, sel_ref[...], preferred_element_type=jnp.float32)


# ----------------------------------------------------------------------------
# Wrapper
# ----------------------------------------------------------------------------
def _fold_bn(sum_, sq_, count, gamma, beta):
    """Fold batch stats + gamma/beta into a single per-channel (scale, shift)."""
    sums = jnp.sum(sum_[:, :, 0], axis=0)                  # (Cout,)
    sqs = jnp.sum(sq_[:, :, 0], axis=0)
    mu = sums / count
    var = jnp.maximum(sqs / count - mu * mu, 0.0)          # one-pass variance
    rsig = jax.lax.rsqrt(var + EPS)
    scale = gamma * rsig
    shift = beta - mu * scale
    return scale[:, None], shift[:, None]                  # (Cout, 1) each


@jax.jit
def res_stack_forward(x, params):
    """x: (N, Cin, L) float32 (PyTorch NCL layout). Returns (N, Cout, L//2) NCL."""
    N, Cin, L = x.shape
    w1t = params['w1t']                                    # (Cout, Cin)
    Cout = w1t.shape[0]
    assert L % 2 == 0, "MaxPool1d(kernel=2) requires even L"
    f32 = jnp.float32

    # Pack parameters into kernel-friendly shapes (tiny trace-time ops).
    b1 = params['b1'][:, None]                             # (Cout, 1)
    b31 = params['b3_1'][:, None]
    b32 = params['b3_2'][:, None]
    # Fuse the 3 conv taps into one (Cout, 3*Cout) matrix matching vcat's rows.
    w3cat1_t = jnp.concatenate(
        [params['w3_1'][0], params['w3_1'][1], params['w3_1'][2]], axis=0).T
    w3cat2_t = jnp.concatenate(
        [params['w3_2'][0], params['w3_2'][1], params['w3_2'][2]], axis=0).T
    # Even-column selection matrix for MaxPool1d(kernel=2, stride=2).
    sel = (jnp.arange(L)[:, None] == 2 * jnp.arange(L // 2)[None, :]).astype(f32)

    cparams = pltpu.CompilerParams(
        dimension_semantics=("parallel",),                 # megacore on v7x
        vmem_limit_bytes=32 * 1024 * 1024)                 # safe on v5e/v6e/v7x

    def bcast_spec(shape):                                 # grid-invariant operand
        return pl.BlockSpec(shape, lambda i, _n=len(shape): (0,) * _n)

    # --- pass 1: conv1x1 + partial batch stats for BN1 -----------------------
    sum1, sq1 = pl.pallas_call(
        _stem_stats_kernel,
        grid=(N,),
        in_specs=[
            pl.BlockSpec((None, Cin, L), lambda i: (i, 0, 0)),
            bcast_spec((Cout, Cin)),
            bcast_spec((Cout, 1)),
        ],
        out_specs=(
            pl.BlockSpec((None, Cout, 1), lambda i: (i, 0, 0)),
            pl.BlockSpec((None, Cout, 1), lambda i: (i, 0, 0)),
        ),
        out_shape=(
            jax.ShapeDtypeStruct((N, Cout, 1), f32),
            jax.ShapeDtypeStruct((N, Cout, 1), f32),
        ),
        compiler_params=cparams,
    )(x, w1t, b1)
    scale1, shift1 = _fold_bn(sum1, sq1, N * L, params['g1'], params['be1'])

    # --- pass 2: res_unit1 (+ partial batch stats for BN2) -------------------
    h1, sum2, sq2 = pl.pallas_call(
        _res_unit1_kernel,
        grid=(N,),
        in_specs=[
            pl.BlockSpec((None, Cin, L), lambda i: (i, 0, 0)),
            bcast_spec((Cout, Cin)),
            bcast_spec((Cout, 1)),
            bcast_spec((Cout, 1)),
            bcast_spec((Cout, 1)),
            bcast_spec((Cout, 3 * Cout)),
            bcast_spec((Cout, 1)),
        ],
        out_specs=(
            pl.BlockSpec((None, Cout, L), lambda i: (i, 0, 0)),
            pl.BlockSpec((None, Cout, 1), lambda i: (i, 0, 0)),
            pl.BlockSpec((None, Cout, 1), lambda i: (i, 0, 0)),
        ),
        out_shape=(
            jax.ShapeDtypeStruct((N, Cout, L), f32),
            jax.ShapeDtypeStruct((N, Cout, 1), f32),
            jax.ShapeDtypeStruct((N, Cout, 1), f32),
        ),
        compiler_params=cparams,
    )(x, w1t, b1, scale1, shift1, w3cat1_t, b31)
    scale2, shift2 = _fold_bn(sum2, sq2, N * L, params['g2'], params['be2'])

    # --- pass 3: res_unit2 + maxpool ------------------------------------------
    out = pl.pallas_call(
        _res_unit2_pool_kernel,
        grid=(N,),
        in_specs=[
            pl.BlockSpec((None, Cout, L), lambda i: (i, 0, 0)),
            bcast_spec((Cout, 1)),
            bcast_spec((Cout, 1)),
            bcast_spec((Cout, 3 * Cout)),
            bcast_spec((Cout, 1)),
            bcast_spec((L, L // 2)),
        ],
        out_specs=pl.BlockSpec((None, Cout, L // 2), lambda i: (i, 0, 0)),
        out_shape=jax.ShapeDtypeStruct((N, Cout, L // 2), f32),
        compiler_params=cparams,
    )(h1, scale2, shift2, w3cat2_t, b32, sel)

    return out                                             # (N, Cout, L//2), NCL


# ----------------------------------------------------------------------------
# Plain-JAX reference (same math, same NCL layout, no Pallas)
# ----------------------------------------------------------------------------
def reference(x, p):
    def bn(v, g, b):
        mu = jnp.mean(v, axis=(0, 2), keepdims=True)
        var = jnp.mean((v - mu) ** 2, axis=(0, 2), keepdims=True)
        return (v - mu) * jax.lax.rsqrt(var + EPS) * g[None, :, None] + b[None, :, None]

    def conv3(v, w3, b):
        vp = jnp.pad(v, ((0, 0), (0, 0), (1, 1)))
        y = (jnp.einsum('co,ncl->nol', w3[0], vp[:, :, :-2])
             + jnp.einsum('co,ncl->nol', w3[1], vp[:, :, 1:-1])
             + jnp.einsum('co,ncl->nol', w3[2], vp[:, :, 2:]))
        return y + b[None, :, None]

    def unit(v, g, be, w3, b3):
        return jnp.maximum(conv3(bn(v, g, be), w3, b3) + v, 0.0)

    h = jnp.einsum('oc,ncl->nol', p['w1t'], x) + p['b1'][None, :, None]
    h = unit(h, p['g1'], p['be1'], p['w3_1'], p['b3_1'])
    h = unit(h, p['g2'], p['be2'], p['w3_2'], p['b3_2'])
    N, C, L = h.shape
    return jnp.max(h.reshape(N, C, L // 2, 2), axis=-1)


def init_params(key, cin, cout):
    """Deterministic synthetic parameters (shapes match the nn.Module)."""
    ks = jax.random.split(key, 10)
    f32 = jnp.float32
    return {
        # Conv1d(cin, cout, k=1): PyTorch weight (cout, cin, 1) stored as (cout, cin)
        'w1t':  jax.random.normal(ks[0], (cout, cin), f32) / np.sqrt(cin),
        'b1':   0.1 * jax.random.normal(ks[1], (cout,), f32),
        # Res_Unit 1: BN gamma/beta + Conv1d(cout, cout, k=3) taps (tap, in, out)
        'g1':   1.0 + 0.1 * jax.random.normal(ks[2], (cout,), f32),
        'be1':  0.1 * jax.random.normal(ks[3], (cout,), f32),
        'w3_1': jax.random.normal(ks[4], (3, cout, cout), f32) / np.sqrt(3 * cout),
        'b3_1': 0.1 * jax.random.normal(ks[5], (cout,), f32),
        # Res_Unit 2
        'g2':   1.0 + 0.1 * jax.random.normal(ks[6], (cout,), f32),
        'be2':  0.1 * jax.random.normal(ks[7], (cout,), f32),
        'w3_2': jax.random.normal(ks[8], (3, cout, cout), f32) / np.sqrt(3 * cout),
        'b3_2': 0.1 * jax.random.normal(ks[9], (cout,), f32),
    }


if __name__ == "__main__":
    # Small shapes; L=128 keeps the lane (length) dimension aligned/lane-dense.
    N, Cin, L, Cout = 4, 4, 128, 32
    key = jax.random.PRNGKey(0)
    kx, kp = jax.random.split(key)

    x = jax.random.normal(kx, (N, Cin, L), jnp.float32)    # PyTorch NCL input
    params = init_params(kp, Cin, Cout)

    out = jax.block_until_ready(res_stack_forward(x, params))
    assert out.shape == (N, Cout, L // 2), out.shape

    ref = jax.block_until_ready(reference(x, params))
    err = float(jnp.max(jnp.abs(out - ref)))
    assert jnp.allclose(out, ref, rtol=2e-2, atol=2e-2), f"max abs err {err}"

    print("KERNEL_OK")
</pallas_src>

<mosaic_0001>
module attributes {stable_mosaic.version = 11 : i64} {
  func.func @_stem_stats_kernel(%arg0: i32, %arg1: memref<1x4x128xf32, #tpu.memory_space<vmem>>, %arg2: memref<32x4xf32, #tpu.memory_space<vmem>>, %arg3: memref<32x1xf32, #tpu.memory_space<vmem>>, %arg4: memref<1x32x1xf32, #tpu.memory_space<vmem>>, %arg5: memref<1x32x1xf32, #tpu.memory_space<vmem>>) attributes {dimension_semantics = [#tpu.dimension_semantics<parallel>], iteration_bounds = array<i64: 4>, scalar_prefetch = 0 : i64, scratch_operands = 0 : i64, tpu.core_type = #tpu.core_type<tc>, window_params = [{transform_indices = @transform_0, window_bounds = array<i64: 1, 4, 128>}, {pipeline_mode = #tpu.pipeline_mode<synchronous>, transform_indices = @transform_1, window_bounds = array<i64: 32, 4>}, {pipeline_mode = #tpu.pipeline_mode<synchronous>, transform_indices = @transform_2, window_bounds = array<i64: 32, 1>}, {transform_indices = @transform_3, window_bounds = array<i64: 1, 32, 1>}, {transform_indices = @transform_4, window_bounds = array<i64: 1, 32, 1>}]} {
    %c0 = arith.constant 0 : index
    %c0_0 = arith.constant 0 : index
    %0 = vector.load %arg2[%c0, %c0_0] : memref<32x4xf32, #tpu.memory_space<vmem>>, vector<32x4xf32>
    %c0_1 = arith.constant 0 : index
    %c0_2 = arith.constant 0 : index
    %c0_3 = arith.constant 0 : index
    %1 = vector.load %arg1[%c0_1, %c0_2, %c0_3] : memref<1x4x128xf32, #tpu.memory_space<vmem>>, vector<1x4x128xf32>
    %2 = vector.shape_cast %1 : vector<1x4x128xf32> to vector<4x128xf32>
    %cst = arith.constant dense<0.000000e+00> : vector<32x128xf32>
    %3 = tpu.matmul %0, %2, %cst {dimension_numbers = #tpu.dot_dimension_numbers<[1], [0], [0], [1], [0, 0, 1, 1], [], []>} : vector<32x4xf32>, vector<4x128xf32>, vector<32x128xf32> -> vector<32x128xf32>
    %c0_4 = arith.constant 0 : index
    %c0_5 = arith.constant 0 : index
    %4 = vector.load %arg3[%c0_4, %c0_5] : memref<32x1xf32, #tpu.memory_space<vmem>>, vector<32x1xf32>
    %5 = vector.broadcast %4 : vector<32x1xf32> to vector<32x128xf32>
    %6 = arith.addf %3, %5 : vector<32x128xf32>
    %cst_6 = arith.constant dense<0.000000e+00> : vector<32xf32>
    %7 = vector.multi_reduction <add>, %6, %cst_6 [1] : vector<32x128xf32> to vector<32xf32>
    %8 = vector.shape_cast %7 : vector<32xf32> to vector<32x1xf32>
    %c0_7 = arith.constant 0 : index
    %c0_8 = arith.constant 0 : index
    %c0_9 = arith.constant 0 : index
    %9 = vector.load %arg4[%c0_7, %c0_8, %c0_9] : memref<1x32x1xf32, #tpu.memory_space<vmem>>, vector<1x32x1xf32>
    %10 = vector.shape_cast %9 : vector<1x32x1xf32> to vector<32x1xf32>
    %11 = vector.shape_cast %8 : vector<32x1xf32> to vector<1x32x1xf32>
    tpu.vector_store %arg4[%c0_7, %c0_8, %c0_9], %11 {strides = array<i32>} : memref<1x32x1xf32, #tpu.memory_space<vmem>>, vector<1x32x1xf32>,
    %12 = arith.mulf %6, %6 : vector<32x128xf32>
    %cst_10 = arith.constant dense<0.000000e+00> : vector<32xf32>
    %13 = vector.multi_reduction <add>, %12, %cst_10 [1] : vector<32x128xf32> to vector<32xf32>
    %14 = vector.shape_cast %13 : vector<32xf32> to vector<32x1xf32>
    %c0_11 = arith.constant 0 : index
    %c0_12 = arith.constant 0 : index
    %c0_13 = arith.constant 0 : index
    %15 = vector.load %arg5[%c0_11, %c0_12, %c0_13] : memref<1x32x1xf32, #tpu.memory_space<vmem>>, vector<1x32x1xf32>
    %16 = vector.shape_cast %15 : vector<1x32x1xf32> to vector<32x1xf32>
    %17 = vector.shape_cast %14 : vector<32x1xf32> to vector<1x32x1xf32>
    tpu.vector_store %arg5[%c0_11, %c0_12, %c0_13], %17 {strides = array<i32>} : memref<1x32x1xf32, #tpu.memory_space<vmem>>, vector<1x32x1xf32>,
    return
  }
  func.func @transform_0(%arg0: i32) -> (i32, i32, i32) {
    %c0_i32 = arith.constant 0 : i32
    %c0_i32_0 = arith.constant 0 : i32
    %c0_i32_1 = arith.constant 0 : i32
    return %arg0, %c0_i32, %c0_i32_0 : i32, i32, i32
  }
  func.func @transform_1(%arg0: i32) -> (i32, i32) {
    %c0_i32 = arith.constant 0 : i32
    %c0_i32_0 = arith.constant 0 : i32
    %c0_i32_1 = arith.constant 0 : i32
    return %c0_i32, %c0_i32_0 : i32, i32
  }
  func.func @transform_2(%arg0: i32) -> (i32, i32) {
    %c0_i32 = arith.constant 0 : i32
    %c0_i32_0 = arith.constant 0 : i32
    %c0_i32_1 = arith.constant 0 : i32
    return %c0_i32, %c0_i32_0 : i32, i32
  }
  func.func @transform_3(%arg0: i32) -> (i32, i32, i32) {
    %c0_i32 = arith.constant 0 : i32
    %c0_i32_0 = arith.constant 0 : i32
    %c0_i32_1 = arith.constant 0 : i32
    return %arg0, %c0_i32, %c0_i32_0 : i32, i32, i32
  }
  func.func @transform_4(%arg0: i32) -> (i32, i32, i32) {
    %c0_i32 = arith.constant 0 : i32
    %c0_i32_0 = arith.constant 0 : i32
    %c0_i32_1 = arith.constant 0 : i32
    return %arg0, %c0_i32, %c0_i32_0 : i32, i32, i32
  }
}

module attributes {stable_mosaic.version = 11 : i64} {
  func.func @_res_unit1_kernel(%arg0: i32, %arg1: memref<1x4x128xf32, #tpu.memory_space<vmem>>, %arg2: memref<32x4xf32, #tpu.memory_space<vmem>>, %arg3: memref<32x1xf32, #tpu.memory_space<vmem>>, %arg4: memref<32x1xf32, #tpu.memory_space<vmem>>, %arg5: memref<32x1xf32, #tpu.memory_space<vmem>>, %arg6: memref<32x96xf32, #tpu.memory_space<vmem>>, %arg7: memref<32x1xf32, #tpu.memory_space<vmem>>, %arg8: memref<1x32x128xf32, #tpu.memory_space<vmem>>, %arg9: memref<1x32x1xf32, #tpu.memory_space<vmem>>, %arg10: memref<1x32x1xf32, #tpu.memory_space<vmem>>) attributes {dimension_semantics = [#tpu.dimension_semantics<parallel>], iteration_bounds = array<i64: 4>, scalar_prefetch = 0 : i64, scratch_operands = 0 : i64, tpu.core_type = #tpu.core_type<tc>, window_params = [{transform_indices = @transform_0, window_bounds = array<i64: 1, 4, 128>}, {pipeline_mode = #tpu.pipeline_mode<synchronous>, transform_indices = @transform_1, window_bounds = array<i64: 32, 4>}, {pipeline_mode = #tpu.pipeline_mode<synchronous>, transform_indices = @transform_2, window_bounds = array<i64: 32, 1>}, {pipeline_mode = #tpu.pipeline_mode<synchronous>, transform_indices = @transform_3, window_bounds = array<i64: 32, 1>}, {pipeline_mode = #tpu.pipeline_mode<synchronous>, transform_indices = @transform_4, window_bounds = array<i64: 32, 1>}, {pipeline_mode = #tpu.pipeline_mode<synchronous>, transform_indices = @transform_5, window_bounds = array<i64: 32, 96>}, {pipeline_mode = #tpu.pipeline_mode<synchronous>, transform_indices = @transform_6, window_bounds = array<i64: 32, 1>}, {transform_indices = @transform_7, window_bounds = array<i64: 1, 32, 128>}, {transform_indices = @transform_8, window_bounds = array<i64: 1, 32, 1>}, {transform_indices = @transform_9, window_bounds = array<i64: 1, 32, 1>}]} {
    %c0 = arith.constant 0 : index
    %c0_0 = arith.constant 0 : index
    %0 = vector.load %arg2[%c0, %c0_0] : memref<32x4xf32, #tpu.memory_space<vmem>>, vector<32x4xf32>
    %c0_1 = arith.constant 0 : index
    %c0_2 = arith.constant 0 : index
    %c0_3 = arith.constant 0 : index
    %1 = vector.load %arg1[%c0_1, %c0_2, %c0_3] : memref<1x4x128xf32, #tpu.memory_space<vmem>>, vector<1x4x128xf32>
    %2 = vector.shape_cast %1 : vector<1x4x128xf32> to vector<4x128xf32>
    %cst = arith.constant dense<0.000000e+00> : vector<32x128xf32>
    %3 = tpu.matmul %0, %2, %cst {dimension_numbers = #tpu.dot_dimension_numbers<[1], [0], [0], [1], [0, 0, 1, 1], [], []>} : vector<32x4xf32>, vector<4x128xf32>, vector<32x128xf32> -> vector<32x128xf32>
    %c0_4 = arith.constant 0 : index
    %c0_5 = arith.constant 0 : index
    %4 = vector.load %arg3[%c0_4, %c0_5] : memref<32x1xf32, #tpu.memory_space<vmem>>, vector<32x1xf32>
    %5 = vector.broadcast %4 : vector<32x1xf32> to vector<32x128xf32>
    %6 = arith.addf %3, %5 : vector<32x128xf32>
    %c0_6 = arith.constant 0 : index
    %c0_7 = arith.constant 0 : index
    %7 = vector.load %arg4[%c0_6, %c0_7] : memref<32x1xf32, #tpu.memory_space<vmem>>, vector<32x1xf32>
    %c0_8 = arith.constant 0 : index
    %c0_9 = arith.constant 0 : index
    %8 = vector.load %arg5[%c0_8, %c0_9] : memref<32x1xf32, #tpu.memory_space<vmem>>, vector<32x1xf32>
    %c0_10 = arith.constant 0 : index
    %c0_11 = arith.constant 0 : index
    %9 = vector.load %arg6[%c0_10, %c0_11] : memref<32x96xf32, #tpu.memory_space<vmem>>, vector<32x96xf32>
    %c0_12 = arith.constant 0 : index
    %c0_13 = arith.constant 0 : index
    %10 = vector.load %arg7[%c0_12, %c0_13] : memref<32x1xf32, #tpu.memory_space<vmem>>, vector<32x1xf32>
    %11 = vector.broadcast %7 : vector<32x1xf32> to vector<32x128xf32>
    %12 = arith.mulf %6, %11 : vector<32x128xf32>
    %13 = vector.broadcast %8 : vector<32x1xf32> to vector<32x128xf32>
    %14 = arith.addf %12, %13 : vector<32x128xf32>
    %15 = tpu.iota {dimensions = array<i32: 1>} : vector<1x128xi32>
    %c0_i32 = arith.constant 0 : i32
    %16 = vector.broadcast %c0_i32 : i32 to vector<1x128xi32>
    %17 = arith.cmpi eq, %15, %16 : vector<1x128xi32>
    %c1_i32 = arith.constant 1 : i32
    %18 = tpu.dynamic_rotate %14 by %c1_i32 dim 1 : vector<32x128xf32>, i32 -> vector<32x128xf32>
    %cst_14 = arith.constant 0.000000e+00 : f32
    %19 = vector.shape_cast %17 : vector<1x128xi1> to vector<1x128xi1>
    %20 = vector.broadcast %19 : vector<1x128xi1> to vector<32x128xi1>
    %21 = vector.broadcast %cst_14 : f32 to vector<32x128xf32>
    %22 = arith.select %20, %21, %18 : vector<32x128xi1>, vector<32x128xf32>
    %c127_i32 = arith.constant 127 : i32
    %23 = vector.broadcast %c127_i32 : i32 to vector<1x128xi32>
    %24 = arith.cmpi eq, %15, %23 : vector<1x128xi32>
    %c127_i32_15 = arith.constant 127 : i32
    %25 = tpu.dynamic_rotate %14 by %c127_i32_15 dim 1 : vector<32x128xf32>, i32 -> vector<32x128xf32>
    %cst_16 = arith.constant 0.000000e+00 : f32
    %26 = vector.shape_cast %24 : vector<1x128xi1> to vector<1x128xi1>
    %27 = vector.broadcast %26 : vector<1x128xi1> to vector<32x128xi1>
    %28 = vector.broadcast %cst_16 : f32 to vector<32x128xf32>
    %29 = arith.select %27, %28, %25 : vector<32x128xi1>, vector<32x128xf32>
    %30 = tpu.concatenate %22, %14, %29 in 0 : vector<32x128xf32>, vector<32x128xf32>, vector<32x128xf32> -> vector<96x128xf32>
    %cst_17 = arith.constant dense<0.000000e+00> : vector<32x128xf32>
    %31 = tpu.matmul %9, %30, %cst_17 {dimension_numbers = #tpu.dot_dimension_numbers<[1], [0], [0], [1], [0, 0, 1, 1], [], []>} : vector<32x96xf32>, vector<96x128xf32>, vector<32x128xf32> -> vector<32x128xf32>
    %32 = vector.broadcast %10 : vector<32x1xf32> to vector<32x128xf32>
    %33 = arith.addf %31, %32 : vector<32x128xf32>
    %34 = arith.addf %33, %6 : vector<32x128xf32>
    %cst_18 = arith.constant 0.000000e+00 : f32
    %35 = vector.broadcast %cst_18 : f32 to vector<32x128xf32>
    %36 = arith.maximumf %34, %35 : vector<32x128xf32>
    %c0_19 = arith.constant 0 : index
    %c0_20 = arith.constant 0 : index
    %c0_21 = arith.constant 0 : index
    %37 = vector.load %arg8[%c0_19, %c0_20, %c0_21] : memref<1x32x128xf32, #tpu.memory_space<vmem>>, vector<1x32x128xf32>
    %38 = vector.shape_cast %37 : vector<1x32x128xf32> to vector<32x128xf32>
    %39 = vector.shape_cast %36 : vector<32x128xf32> to vector<1x32x128xf32>
    tpu.vector_store %arg8[%c0_19, %c0_20, %c0_21], %39 {strides = array<i32>} : memref<1x32x128xf32, #tpu.memory_space<vmem>>, vector<1x32x128xf32>,
    %cst_22 = arith.constant dense<0.000000e+00> : vector<32xf32>
    %40 = vector.multi_reduction <add>, %36, %cst_22 [1] : vector<32x128xf32> to vector<32xf32>
    %41 = vector.shape_cast %40 : vector<32xf32> to vector<32x1xf32>
    %c0_23 = arith.constant 0 : index
    %c0_24 = arith.constant 0 : index
    %c0_25 = arith.constant 0 : index
    %42 = vector.load %arg9[%c0_23, %c0_24, %c0_25] : memref<1x32x1xf32, #tpu.memory_space<vmem>>, vector<1x32x1xf32>
    %43 = vector.shape_cast %42 : vector<1x32x1xf32> to vector<32x1xf32>
    %44 = vector.shape_cast %41 : vector<32x1xf32> to vector<1x32x1xf32>
    tpu.vector_store %arg9[%c0_23, %c0_24, %c0_25], %44 {strides = array<i32>} : memref<1x32x1xf32, #tpu.memory_space<vmem>>, vector<1x32x1xf32>,
    %45 = arith.mulf %36, %36 : vector<32x128xf32>
    %cst_26 = arith.constant dense<0.000000e+00> : vector<32xf32>
    %46 = vector.multi_reduction <add>, %45, %cst_26 [1] : vector<32x128xf32> to vector<32xf32>
    %47 = vector.shape_cast %46 : vector<32xf32> to vector<32x1xf32>
    %c0_27 = arith.constant 0 : index
    %c0_28 = arith.constant 0 : index
    %c0_29 = arith.constant 0 : index
    %48 = vector.load %arg10[%c0_27, %c0_28, %c0_29] : memref<1x32x1xf32, #tpu.memory_space<vmem>>, vector<1x32x1xf32>
    %49 = vector.shape_cast %48 : vector<1x32x1xf32> to vector<32x1xf32>
    %50 = vector.shape_cast %47 : vector<32x1xf32> to vector<1x32x1xf32>
    tpu.vector_store %arg10[%c0_27, %c0_28, %c0_29], %50 {strides = array<i32>} : memref<1x32x1xf32, #tpu.memory_space<vmem>>, vector<1x32x1xf32>,
    return
  }
  func.func @transform_0(%arg0: i32) -> (i32, i32, i32) {
    %c0_i32 = arith.constant 0 : i32
    %c0_i32_0 = arith.constant 0 : i32
    %c0_i32_1 = arith.constant 0 : i32
    return %arg0, %c0_i32, %c0_i32_0 : i32, i32, i32
  }
  func.func @transform_1(%arg0: i32) -> (i32, i32) {
    %c0_i32 = arith.constant 0 : i32
    %c0_i32_0 = arith.constant 0 : i32
    %c0_i32_1 = arith.constant 0 : i32
    return %c0_i32, %c0_i32_0 : i32, i32
  }
  func.func @transform_2(%arg0: i32) -> (i32, i32) {
    %c0_i32 = arith.constant 0 : i32
    %c0_i32_0 = arith.constant 0 : i32
    %c0_i32_1 = arith.constant 0 : i32
    return %c0_i32, %c0_i32_0 : i32, i32
  }
  func.func @transform_3(%arg0: i32) -> (i32, i32) {
    %c0_i32 = arith.constant 0 : i32
    %c0_i32_0 = arith.constant 0 : i32
    %c0_i32_1 = arith.constant 0 : i32
    return %c0_i32, %c0_i32_0 : i32, i32
  }
  func.func @transform_4(%arg0: i32) -> (i32, i32) {
    %c0_i32 = arith.constant 0 : i32
    %c0_i32_0 = arith.constant 0 : i32
    %c0_i32_1 = arith.constant 0 : i32
    return %c0_i32, %c0_i32_0 : i32, i32
  }
  func.func @transform_5(%arg0: i32) -> (i32, i32) {
    %c0_i32 = arith.constant 0 : i32
    %c0_i32_0 = arith.constant 0 : i32
    %c0_i32_1 = arith.constant 0 : i32
    return %c0_i32, %c0_i32_0 : i32, i32
  }
  func.func @transform_6(%arg0: i32) -> (i32, i32) {
    %c0_i32 = arith.constant 0 : i32
    %c0_i32_0 = arith.constant 0 : i32
    %c0_i32_1 = arith.constant 0 : i32
    return %c0_i32, %c0_i32_0 : i32, i32
  }
  func.func @transform_7(%arg0: i32) -> (i32, i32, i32) {
    %c0_i32 = arith.constant 0 : i32
    %c0_i32_0 = arith.constant 0 : i32
    %c0_i32_1 = arith.constant 0 : i32
    return %arg0, %c0_i32, %c0_i32_0 : i32, i32, i32
  }
  func.func @transform_8(%arg0: i32) -> (i32, i32, i32) {
    %c0_i32 = arith.constant 0 : i32
    %c0_i32_0 = arith.constant 0 : i32
    %c0_i32_1 = arith.constant 0 : i32
    return %arg0, %c0_i32, %c0_i32_0 : i32, i32, i32
  }
  func.func @transform_9(%arg0: i32) -> (i32, i32, i32) {
    %c0_i32 = arith.constant 0 : i32
    %c0_i32_0 = arith.constant 0 : i32
    %c0_i32_1 = arith.constant 0 : i32
    return %arg0, %c0_i32, %c0_i32_0 : i32, i32, i32
  }
}

module attributes {stable_mosaic.version = 11 : i64} {
  func.func @_res_unit2_pool_kernel(%arg0: i32, %arg1: memref<1x32x128xf32, #tpu.memory_space<vmem>>, %arg2: memref<32x1xf32, #tpu.memory_space<vmem>>, %arg3: memref<32x1xf32, #tpu.memory_space<vmem>>, %arg4: memref<32x96xf32, #tpu.memory_space<vmem>>, %arg5: memref<32x1xf32, #tpu.memory_space<vmem>>, %arg6: memref<128x64xf32, #tpu.memory_space<vmem>>, %arg7: memref<1x32x64xf32, #tpu.memory_space<vmem>>) attributes {dimension_semantics = [#tpu.dimension_semantics<parallel>], iteration_bounds = array<i64: 4>, scalar_prefetch = 0 : i64, scratch_operands = 0 : i64, tpu.core_type = #tpu.core_type<tc>, window_params = [{transform_indices = @transform_0, window_bounds = array<i64: 1, 32, 128>}, {pipeline_mode = #tpu.pipeline_mode<synchronous>, transform_indices = @transform_1, window_bounds = array<i64: 32, 1>}, {pipeline_mode = #tpu.pipeline_mode<synchronous>, transform_indices = @transform_2, window_bounds = array<i64: 32, 1>}, {pipeline_mode = #tpu.pipeline_mode<synchronous>, transform_indices = @transform_3, window_bounds = array<i64: 32, 96>}, {pipeline_mode = #tpu.pipeline_mode<synchronous>, transform_indices = @transform_4, window_bounds = array<i64: 32, 1>}, {pipeline_mode = #tpu.pipeline_mode<synchronous>, transform_indices = @transform_5, window_bounds = array<i64: 128, 64>}, {transform_indices = @transform_6, window_bounds = array<i64: 1, 32, 64>}]} {
    %c0 = arith.constant 0 : index
    %c0_0 = arith.constant 0 : index
    %c0_1 = arith.constant 0 : index
    %0 = vector.load %arg1[%c0, %c0_0, %c0_1] : memref<1x32x128xf32, #tpu.memory_space<vmem>>, vector<1x32x128xf32>
    %1 = vector.shape_cast %0 : vector<1x32x128xf32> to vector<32x128xf32>
    %c0_2 = arith.constant 0 : index
    %c0_3 = arith.constant 0 : index
    %2 = vector.load %arg2[%c0_2, %c0_3] : memref<32x1xf32, #tpu.memory_space<vmem>>, vector<32x1xf32>
    %c0_4 = arith.constant 0 : index
    %c0_5 = arith.constant 0 : index
    %3 = vector.load %arg3[%c0_4, %c0_5] : memref<32x1xf32, #tpu.memory_space<vmem>>, vector<32x1xf32>
    %c0_6 = arith.constant 0 : index
    %c0_7 = arith.constant 0 : index
    %4 = vector.load %arg4[%c0_6, %c0_7] : memref<32x96xf32, #tpu.memory_space<vmem>>, vector<32x96xf32>
    %c0_8 = arith.constant 0 : index
    %c0_9 = arith.constant 0 : index
    %5 = vector.load %arg5[%c0_8, %c0_9] : memref<32x1xf32, #tpu.memory_space<vmem>>, vector<32x1xf32>
    %6 = vector.broadcast %2 : vector<32x1xf32> to vector<32x128xf32>
    %7 = arith.mulf %1, %6 : vector<32x128xf32>
    %8 = vector.broadcast %3 : vector<32x1xf32> to vector<32x128xf32>
    %9 = arith.addf %7, %8 : vector<32x128xf32>
    %10 = tpu.iota {dimensions = array<i32: 1>} : vector<1x128xi32>
    %c0_i32 = arith.constant 0 : i32
    %11 = vector.broadcast %c0_i32 : i32 to vector<1x128xi32>
    %12 = arith.cmpi eq, %10, %11 : vector<1x128xi32>
    %c1_i32 = arith.constant 1 : i32
    %13 = tpu.dynamic_rotate %9 by %c1_i32 dim 1 : vector<32x128xf32>, i32 -> vector<32x128xf32>
    %cst = arith.constant 0.000000e+00 : f32
    %14 = vector.shape_cast %12 : vector<1x128xi1> to vector<1x128xi1>
    %15 = vector.broadcast %14 : vector<1x128xi1> to vector<32x128xi1>
    %16 = vector.broadcast %cst : f32 to vector<32x128xf32>
    %17 = arith.select %15, %16, %13 : vector<32x128xi1>, vector<32x128xf32>
    %c127_i32 = arith.constant 127 : i32
    %18 = vector.broadcast %c127_i32 : i32 to vector<1x128xi32>
    %19 = arith.cmpi eq, %10, %18 : vector<1x128xi32>
    %c127_i32_10 = arith.constant 127 : i32
    %20 = tpu.dynamic_rotate %9 by %c127_i32_10 dim 1 : vector<32x128xf32>, i32 -> vector<32x128xf32>
    %cst_11 = arith.constant 0.000000e+00 : f32
    %21 = vector.shape_cast %19 : vector<1x128xi1> to vector<1x128xi1>
    %22 = vector.broadcast %21 : vector<1x128xi1> to vector<32x128xi1>
    %23 = vector.broadcast %cst_11 : f32 to vector<32x128xf32>
    %24 = arith.select %22, %23, %20 : vector<32x128xi1>, vector<32x128xf32>
    %25 = tpu.concatenate %17, %9, %24 in 0 : vector<32x128xf32>, vector<32x128xf32>, vector<32x128xf32> -> vector<96x128xf32>
    %cst_12 = arith.constant dense<0.000000e+00> : vector<32x128xf32>
    %26 = tpu.matmul %4, %25, %cst_12 {dimension_numbers = #tpu.dot_dimension_numbers<[1], [0], [0], [1], [0, 0, 1, 1], [], []>} : vector<32x96xf32>, vector<96x128xf32>, vector<32x128xf32> -> vector<32x128xf32>
    %27 = vector.broadcast %5 : vector<32x1xf32> to vector<32x128xf32>
    %28 = arith.addf %26, %27 : vector<32x128xf32>
    %29 = arith.addf %28, %1 : vector<32x128xf32>
    %cst_13 = arith.constant 0.000000e+00 : f32
    %30 = vector.broadcast %cst_13 : f32 to vector<32x128xf32>
    %31 = arith.maximumf %29, %30 : vector<32x128xf32>
    %c127_i32_14 = arith.constant 127 : i32
    %32 = tpu.dynamic_rotate %31 by %c127_i32_14 dim 1 : vector<32x128xf32>, i32 -> vector<32x128xf32>
    %33 = arith.maximumf %31, %32 : vector<32x128xf32>
    %c0_15 = arith.constant 0 : index
    %c0_16 = arith.constant 0 : index
    %34 = vector.load %arg6[%c0_15, %c0_16] : memref<128x64xf32, #tpu.memory_space<vmem>>, vector<128x64xf32>
    %cst_17 = arith.constant dense<0.000000e+00> : vector<32x64xf32>
    %35 = tpu.matmul %33, %34, %cst_17 {dimension_numbers = #tpu.dot_dimension_numbers<[1], [0], [0], [1], [0, 0, 1, 1], [], []>} : vector<32x128xf32>, vector<128x64xf32>, vector<32x64xf32> -> vector<32x64xf32>
    %c0_18 = arith.constant 0 : index
    %c0_19 = arith.constant 0 : index
    %c0_20 = arith.constant 0 : index
    %36 = vector.load %arg7[%c0_18, %c0_19, %c0_20] : memref<1x32x64xf32, #tpu.memory_space<vmem>>, vector<1x32x64xf32>
    %37 = vector.shape_cast %36 : vector<1x32x64xf32> to vector<32x64xf32>
    %38 = vector.shape_cast %35 : vector<32x64xf32> to vector<1x32x64xf32>
    tpu.vector_store %arg7[%c0_18, %c0_19, %c0_20], %38 {strides = array<i32>} : memref<1x32x64xf32, #tpu.memory_space<vmem>>, vector<1x32x64xf32>,
    return
  }
  func.func @transform_0(%arg0: i32) -> (i32, i32, i32) {
    %c0_i32 = arith.constant 0 : i32
    %c0_i32_0 = arith.constant 0 : i32
    %c0_i32_1 = arith.constant 0 : i32
    return %arg0, %c0_i32, %c0_i32_0 : i32, i32, i32
  }
  func.func @transform_1(%arg0: i32) -> (i32, i32) {
    %c0_i32 = arith.constant 0 : i32
    %c0_i32_0 = arith.constant 0 : i32
    %c0_i32_1 = arith.constant 0 : i32
    return %c0_i32, %c0_i32_0 : i32, i32
  }
  func.func @transform_2(%arg0: i32) -> (i32, i32) {
    %c0_i32 = arith.constant 0 : i32
    %c0_i32_0 = arith.constant 0 : i32
    %c0_i32_1 = arith.constant 0 : i32
    return %c0_i32, %c0_i32_0 : i32, i32
  }
  func.func @transform_3(%arg0: i32) -> (i32, i32) {
    %c0_i32 = arith.constant 0 : i32
    %c0_i32_0 = arith.constant 0 : i32
    %c0_i32_1 = arith.constant 0 : i32
    return %c0_i32, %c0_i32_0 : i32, i32
  }
  func.func @transform_4(%arg0: i32) -> (i32, i32) {
    %c0_i32 = arith.constant 0 : i32
    %c0_i32_0 = arith.constant 0 : i32
    %c0_i32_1 = arith.constant 0 : i32
    return %c0_i32, %c0_i32_0 : i32, i32
  }
  func.func @transform_5(%arg0: i32) -> (i32, i32) {
    %c0_i32 = arith.constant 0 : i32
    %c0_i32_0 = arith.constant 0 : i32
    %c0_i32_1 = arith.constant 0 : i32
    return %c0_i32, %c0_i32_0 : i32, i32
  }
  func.func @transform_6(%arg0: i32) -> (i32, i32, i32) {
    %c0_i32 = arith.constant 0 : i32
    %c0_i32_0 = arith.constant 0 : i32
    %c0_i32_1 = arith.constant 0 : i32
    return %arg0, %c0_i32, %c0_i32_0 : i32, i32, i32
  }
}

</mosaic_0001>

<llo_original>
// kernel: res_stack_forward.3
$region0: #{res_stack_forward.3}
  #allocation0 [shape = 'u32[]', space=smem, size = 0x4, offset = 0x4, fixed_abs, tag = 'smem constant byte address 0x4 - core index']
  #allocation1 [shape = 'u32[144,128]{1,0:T(1,128)}', space=vmem, size = 0x12000, scoped, tag = 'internal scratch']
  %s0 = inlined_call_operand.vmem [shape: f32[4,4,128], index: 0, kind: input, shape index: {}]
  %s1 = inlined_call_operand.vmem [shape: f32[32,4], index: 1, kind: input, shape index: {}]
  %s2 = inlined_call_operand.vmem [shape: f32[32,1], index: 2, kind: input, shape index: {}]
  %s3 = inlined_call_operand.vmem [shape: f32[4,32,1], index: 3, kind: output, shape index: {0}]
  %s4 = inlined_call_operand.vmem [shape: f32[4,32,1], index: 4, kind: output, shape index: {1}]
  %5 = xla_tuple %s3, %s4
  %s6 = sld [smem:[#allocation0]]
  $region53: #{res_stack_forward.3} parent=0
    _
  %s8 = ssub.s32 1, %s6
  %s9 = scalar_select 0, %s8, %s6
  loop: start=0, step=1, limit=6
  $region2: #{res_stack_forward.3} parent=0 // loop_pre_header
    _
  $region3: #{res_stack_forward.3} parent=0 // loop_header
    %s11 = sphi 0, %s15
    %p12 = scmp.ge.s32.totalorder %s11, 6
    %s21 = sphi 0, %s23
    %s24 = sphi 0, %s21
    %s25 = sphi 0, %s24
    %s41 = sphi 0, %s25
    %s45 = sphi 0, %s45
    %s47 = sphi 0, %s45
    %s48 = sphi 0, %s47
    %s62 = sphi 0, %s48
    %s66 = sphi 0, %s66
    %s68 = sphi 0, %s66
    %s69 = sphi 0, %s68
    %s83 = sphi 0, %s69
    %s89 = sphi 0, %s91
    %s92 = sphi 0, %s89
    %s93 = sphi 0, %s92
    %s109 = sphi 0, %s93
    %s115 = sphi 0, %s117
    %s118 = sphi 0, %s115
    %s119 = sphi 0, %s118
    %s135 = sphi 0, %s119
  $region4: #{res_stack_forward.3} parent=0 // loop_header_branch
    %14 = sbr.rel (%p12) target = $region8
  $region5: #{res_stack_forward.3} parent=0 // loop_body
    %s16 = ssub.s32 %s11, 1
    %s17 = ssub.s32 %s11, 2
    %s18 = sadd.s32 %s11, 1
    %s19 = ssub.s32 %s11, %s18
    %p20 = scmp.eq.s32.totalorder %s19, 0
    %s22 = sadd.s32 %s21, 1
    %s23 = scalar_select %p20, %s21, %s22
    %p26 = pneg %p20
    %p27 = scmp.eq.s32.totalorder %s11, 3
    %p28 = por %p26, %p27
    %p29 = scmp.ne.s32.totalorder %s21, %s24
    %p30 = scmp.eq.s32.totalorder %s11, 0
    %p31 = por %p29, %p30
    %p32 = scmp.ne.s32.totalorder %s21, %s24
    %p33 = scmp.eq.s32.totalorder %s16, 3
    %p34 = por %p32, %p33
    %p35 = scmp.ne.s32.totalorder %s24, %s25
    %p36 = scmp.eq.s32.totalorder %s16, 0
    %p37 = por %p35, %p36
    %p38 = scmp.ne.s32.totalorder %s24, %s25
    %p39 = scmp.eq.s32.totalorder %s17, 3
    %p40 = por %p38, %p39
    %p42 = scmp.ne.s32.totalorder %s25, %s41
    %p43 = scmp.eq.s32.totalorder %s17, 0
    %p44 = por %p42, %p43
    %s46 = sadd.s32 %s45, 1
    %p49 = scmp.eq.s32.totalorder %s11, 3
    %p50 = scmp.ne.s32.totalorder %s45, %s47
    %p51 = scmp.eq.s32.totalorder %s11, 0
    %p52 = por %p50, %p51
    %p53 = scmp.ne.s32.totalorder %s45, %s47
    %p54 = scmp.eq.s32.totalorder %s16, 3
    %p55 = por %p53, %p54
    %p56 = scmp.ne.s32.totalorder %s47, %s48
    %p57 = scmp.eq.s32.totalorder %s16, 0
    %p58 = por %p56, %p57
    %p59 = scmp.ne.s32.totalorder %s47, %s48
    %p60 = scmp.eq.s32.totalorder %s17, 3
    %p61 = por %p59, %p60
    %p63 = scmp.ne.s32.totalorder %s48, %s62
    %p64 = scmp.eq.s32.totalorder %s17, 0
    %p65 = por %p63, %p64
    %s67 = sadd.s32 %s66, 1
    %p70 = scmp.eq.s32.totalorder %s11, 3
    %p71 = scmp.ne.s32.totalorder %s66, %s68
    %p72 = scmp.eq.s32.totalorder %s11, 0
    %p73 = por %p71, %p72
    %p74 = scmp.ne.s32.totalorder %s66, %s68
    %p75 = scmp.eq.s32.totalorder %s16, 3
    %p76 = por %p74, %p75
    %p77 = scmp.ne.s32.totalorder %s68, %s69
    %p78 = scmp.eq.s32.totalorder %s16, 0
    %p79 = por %p77, %p78
    %p80 = scmp.ne.s32.totalorder %s68, %s69
    %p81 = scmp.eq.s32.totalorder %s17, 3
    %p82 = por %p80, %p81
    %p84 = scmp.ne.s32.totalorder %s69, %s83
    %p85 = scmp.eq.s32.totalorder %s17, 0
    %p86 = por %p84, %p85
    %s87 = ssub.s32 %s11, %s18
    %p88 = scmp.eq.s32.totalorder %s87, 0
    %s90 = sadd.s32 %s89, 1
    %s91 = scalar_select %p88, %s89, %s90
    %p94 = pneg %p88
    %p95 = scmp.eq.s32.totalorder %s11, 3
    %p96 = por %p94, %p95
    %p97 = scmp.ne.s32.totalorder %s89, %s92
    %p98 = scmp.eq.s32.totalorder %s11, 0
    %p99 = por %p97, %p98
    %p100 = scmp.ne.s32.totalorder %s89, %s92
    %p101 = scmp.eq.s32.totalorder %s16, 3
    %p102 = por %p100, %p101
    %p103 = scmp.ne.s32.totalorder %s92, %s93
    %p104 = scmp.eq.s32.totalorder %s16, 0
    %p105 = por %p103, %p104
    %p106 = scmp.ne.s32.totalorder %s92, %s93
    %p107 = scmp.eq.s32.totalorder %s17, 3
    %p108 = por %p106, %p107
    %p110 = scmp.ne.s32.totalorder %s93, %s109
    %p111 = scmp.eq.s32.totalorder %s17, 0
    %p112 = por %p110, %p111
    %s113 = ssub.s32 %s11, %s18
    %p114 = scmp.eq.s32.totalorder %s113, 0
    %s116 = sadd.s32 %s115, 1
    %s117 = scalar_select %p114, %s115, %s116
    %p120 = pneg %p114
    %p121 = scmp.eq.s32.totalorder %s11, 3
    %p122 = por %p120, %p121
    %p123 = scmp.ne.s32.totalorder %s115, %s118
    %p124 = scmp.eq.s32.totalorder %s11, 0
    %p125 = por %p123, %p124
    %p126 = scmp.ne.s32.totalorder %s115, %s118
    %p127 = scmp.eq.s32.totalorder %s16, 3
    %p128 = por %p126, %p127
    %p129 = scmp.ne.s32.totalorder %s118, %s119
    %p130 = scmp.eq.s32.totalorder %s16, 0
    %p131 = por %p129, %p130
    %p132 = scmp.ne.s32.totalorder %s118, %s119
    %p133 = scmp.eq.s32.totalorder %s17, 3
    %p134 = por %p132, %p133
    %p136 = scmp.ne.s32.totalorder %s119, %s135
    %p137 = scmp.eq.s32.totalorder %s17, 0
    %p138 = por %p136, %p137
    %p139 = scmp.le.s32.totalorder 1, %s11
    %p140 = scmp.lt.s32.totalorder %s11, 5
    %p141 = pnand %p139, %p140
    %p142 = pneg %p141
    // Predicated region
    $region9: #{res_stack_forward.3} parent=5 // pred_check
      _
    $region10: #{res_stack_forward.3} parent=5 // pred_check_branch
      %144 = sbr.rel (%p141) target = $region12
    $region11: #{res_stack_forward.3} parent=5 // pred_region
      %s145 = ssub.s32 %s11, 1
      // Predicated region
      $region13: #{res_stack_forward.3} parent=11 // pred_check
        %p146 = pneg %p58
      $region14: #{res_stack_forward.3} parent=11 // pred_check_branch
        %148 = sbr.rel (%p146) target = $region16
      $region15: #{res_stack_forward.3} parent=11 // pred_region
        _
      $region16: #{res_stack_forward.3} parent=11 // pred_fallthru
        _
      // Predicated region
      $region17: #{res_stack_forward.3} parent=11 // pred_check
        %p149 = pneg %p79
      $region18: #{res_stack_forward.3} parent=11 // pred_check_branch
        %151 = sbr.rel (%p149) target = $region20
      $region19: #{res_stack_forward.3} parent=11 // pred_region
        _
      $region20: #{res_stack_forward.3} parent=11 // pred_fallthru
        _
    $region12: #{res_stack_forward.3} parent=5 // pred_fallthru
      _
    %p152 = scmp.lt.s32.totalorder %s11, 4
    // Predicated region
    $region21: #{res_stack_forward.3} parent=5 // pred_check
      %p153 = pneg %p152
    $region22: #{res_stack_forward.3} parent=5 // pred_check_branch
      %155 = sbr.rel (%p153) target = $region24
    $region23: #{res_stack_forward.3} parent=5 // pred_region
      // Predicated region
      $region25: #{res_stack_forward.3} parent=23 // pred_check
        %p156 = pneg %p31
      $region26: #{res_stack_forward.3} parent=23 // pred_check_branch
        %158 = sbr.rel (%p156) target = $region28
      $region27: #{res_stack_forward.3} parent=23 // pred_region
        %p159 = scmp.lt.s32.totalorder %s11, 3
        %s160 = scalar_select %p159, %s11, 3
        %s161 = smul.addr %s160, 4
        %s162 = scalar_lea.vmem %s0, %s161
      $region28: #{res_stack_forward.3} parent=23 // pred_fallthru
        _
    $region24: #{res_stack_forward.3} parent=5 // pred_fallthru
      _
    %p163 = scmp.le.s32.totalorder 1, %s11
    %p164 = scmp.lt.s32.totalorder %s11, 5
    %p165 = pnand %p163, %p164
    %p166 = pneg %p165
    // Predicated region
    $region29: #{res_stack_forward.3} parent=5 // pred_check
      _
    $region30: #{res_stack_forward.3} parent=5 // pred_check_branch
      %168 = sbr.rel (%p165) target = $region32
    $region31: #{res_stack_forward.3} parent=5 // pred_region
      %s169 = ssub.s32 %s11, 1
      %p170 = scmp.lt.s32.totalorder %s16, 3
      %s171 = scalar_select %p170, %s16, 3
      %s172 = smul.addr %s171, 4
      %s173 = scalar_lea.vmem %s0, %s172
      %p174 = pneg %p37
      %p175 = pneg %p34
      %p176 = pneg %p58
      %p177 = pneg %p55
      %p178 = pneg %p79
      %p179 = pneg %p76
      %p180 = pneg %p105
      %p181 = pneg %p102
      %p182 = scmp.lt.s32.totalorder %s16, 3
      %s183 = scalar_select %p182, %s16, 3
      %s184 = smul.addr %s183, 4
      %s185 = smul.addr %s184, 8
      %s186 = scalar_lea.vmem %s3, %s185
      %p187 = pneg %p131
      %p188 = pneg %p128
      %p189 = scmp.lt.s32.totalorder %s16, 3
      %s190 = scalar_select %p189, %s16, 3
      %s191 = smul.addr %s190, 4
      %s192 = smul.addr %s191, 8
      %s193 = scalar_lea.vmem %s4, %s192
      %p194 = scmp.lt.s32.totalorder %s16, 3
      %s195 = scalar_select %p194, %s16, 3
      %s196 = smul.addr %s195, 4
      %s197 = scalar_lea.vmem %s0, %s196
      %p198 = scmp.lt.s32.totalorder %s16, 3
      %s199 = scalar_select %p198, %s16, 3
      %s200 = smul.addr %s199, 4
      %s201 = smul.addr %s200, 8
      %s202 = scalar_lea.vmem %s3, %s201
      %p203 = scmp.lt.s32.totalorder %s16, 3
      %s204 = scalar_select %p203, %s16, 3
      %s205 = smul.addr %s204, 4
      %s206 = smul.addr %s205, 8
      %s207 = scalar_lea.vmem %s4, %s206
      %v208 = vld [vmem:[%s1] sm:$0xff]
      %v209 = vld [vmem:[%s1 + $0x8] sm:$0xff]
      %v210 = vld [vmem:[%s1 + $0x10] sm:$0xff]
      %v211 = vld [vmem:[%s1 + $0x18] sm:$0xff]
      %v212 = vld [vmem:[%s197] sm:$0xf]
      %v213 = vld [vmem:[%s2] sm:$0xff]
      %v214 = vld [vmem:[%s2 + $0x8] sm:$0xff]
      %v215 = vld [vmem:[%s2 + $0x10] sm:$0xff]
      %v216 = vld [vmem:[%s2 + $0x18] sm:$0xff]
      %218 = vset.pattern.permute.xlu0 0
      %219 = vperm.xlu0 %218, %v213
      %v220 = vpop.permute.xlu0 %219
      %223 = vset.pattern.permute.xlu0 0
      %224 = vperm.xlu0 %223, %v214
      %v225 = vpop.permute.xlu0 %224
      %228 = vset.pattern.permute.xlu0 0
      %229 = vperm.xlu0 %228, %v215
      %v230 = vpop.permute.xlu0 %229
      %233 = vset.pattern.permute.xlu0 0
      %234 = vperm.xlu0 %233, %v216
      %v235 = vpop.permute.xlu0 %234
      %vm237 = vcmask 31744
      %v239 = vsel %vm237, %v208, 0
      %v242 = vsel %vm237, %v209, 0
      %v245 = vsel %vm237, %v210, 0
      %v248 = vsel %vm237, %v211, 0
      %vm250 = vcmask 1043456
      %v252 = vsel %vm250, %v212, 0
      %254 = vmatprep.subr.mxu0 0.0
      %255 = vmatpush1.msra.mxu0 %v252
      %256 = vmatprep.subr.mxu0 0.0
      %257 = vmatpush1.msra.mxu0 0.0
      %258 = vmatprep.subr.mxu0 0.0
      %259 = vmatpush1.msra.mxu0 0.0
      %260 = vmatprep.subr.mxu0 0.0
      %261 = vmatpush1.msra.mxu0 0.0
      %262 = vmatprep.subr.mxu0 0.0
      %263 = vmatpush1.msra.mxu0 0.0
      %264 = vmatprep.subr.mxu0 0.0
      %265 = vmatpush1.msra.mxu0 0.0
      %266 = vmatprep.subr.mxu0 0.0
      %267 = vmatpush1.msra.mxu0 0.0
      %268 = vmatprep.subr.mxu0 0.0
      %269 = vmatpush1.msra.mxu0 0.0
      %270 = vmatprep.subr.mxu0 0.0
      %271 = vmatpush1.msra.mxu0 0.0
      %272 = vmatprep.subr.mxu0 0.0
      %273 = vmatpush1.msra.mxu0 0.0
      %274 = vmatprep.subr.mxu0 0.0
      %275 = vmatpush1.msra.mxu0 0.0
      %276 = vmatprep.subr.mxu0 0.0
      %277 = vmatpush1.msra.mxu0 0.0
      %278 = vmatprep.subr.mxu0 0.0
      %279 = vmatpush1.msra.mxu0 0.0
      %280 = vmatprep.subr.mxu0 0.0
      %281 = vmatpush1.msra.mxu0 0.0
      %282 = vmatprep.subr.mxu0 0.0
      %283 = vmatpush1.msra.mxu0 0.0
      %284 = vmatprep.subr.mxu0 0.0
      %285 = vmatpush1.msra.mxu0 0.0
      %286 = vmatprep.subr.mxu0 0.0
      %287 = vmatpush1.msra.mxu0 0.0
      %288 = vmatprep.subr.mxu0 0.0
      %289 = vmatpush1.msra.mxu0 0.0
      %290 = vmatprep.subr.mxu0 0.0
      %291 = vmatpush1.msra.mxu0 0.0
      %292 = vmatprep.subr.mxu0 0.0
      %293 = vmatpush1.msra.mxu0 0.0
      %294 = vmatprep.subr.mxu0 0.0
      %295 = vmatpush1.msra.mxu0 0.0
      %296 = vmatprep.subr.mxu0 0.0
      %297 = vmatpush1.msra.mxu0 0.0
      %298 = vmatprep.subr.mxu0 0.0
      %299 = vmatpush1.msra.mxu0 0.0
      %300 = vmatprep.subr.mxu0 0.0
      %301 = vmatpush1.msra.mxu0 0.0
      %302 = vmatprep.subr.mxu0 0.0
      %303 = vmatpush1.msra.mxu0 0.0
      %304 = vmatprep.subr.mxu0 0.0
      %305 = vmatpush1.msra.mxu0 0.0
      %306 = vmatprep.subr.mxu0 0.0
      %307 = vmatpush1.msra.mxu0 0.0
      %308 = vmatprep.subr.mxu0 0.0
      %309 = vmatpush1.msra.mxu0 0.0
      %310 = vmatprep.subr.mxu0 0.0
      %311 = vmatpush1.msra.mxu0 0.0
      %312 = vmatprep.subr.mxu0 0.0
      %313 = vmatpush1.msra.mxu0 0.0
      %314 = vmatprep.subr.mxu0 0.0
      %315 = vmatpush1.msra.mxu0 0.0
      %316 = vmatprep.subr.mxu0 0.0
      %317 = vmatpush1.msra.mxu0 0.0
      %318 = vmatprep.mubr.f32.mxu0 0.0
      %319 = vmatmul.mubr.f32.gmra.mrb[0].mxu0 %v239
      %v320 = vpop.f32.mrb[0].mxu0
      %v321 = vadd.f32 %v220, %v320
      %v322 = vpop.f32.mrb[0].mxu0
      %323 = vmatprep.mubr.f32.mxu0 0.0
      %324 = vmatmul.mubr.f32.gmra.mrb[0].mxu0 %v242
      %v325 = vpop.f32.mrb[0].mxu0
      %v326 = vadd.f32 %v225, %v325
      %v327 = vpop.f32.mrb[0].mxu0
      %328 = vmatprep.mubr.f32.mxu0 0.0
      %329 = vmatmul.mubr.f32.gmra.mrb[0].mxu0 %v245
      %v330 = vpop.f32.mrb[0].mxu0
      %v331 = vadd.f32 %v230, %v330
      %v332 = vpop.f32.mrb[0].mxu0
      %333 = vmatprep.mubr.f32.mxu0 0.0
      %334 = vmatmul.mubr.f32.gmra.mrb[0].mxu0 %v248
      %v335 = vpop.f32.mrb[0].mxu0
      %v336 = vadd.f32 %v235, %v335
      %v337 = vpop.f32.mrb[0].mxu0
      %338 = vdwg.mxu0
      %339 = vadd.xlane.f32.xlu0 %v321
      %v340 = vpop.xlane.xlu0 %339
      %341 = vadd.xlane.f32.xlu0 %v326
      %v342 = vpop.xlane.xlu0 %341
      %343 = vadd.xlane.f32.xlu0 %v331
      %v344 = vpop.xlane.xlu0 %343
      %345 = vadd.xlane.f32.xlu0 %v336
      %v346 = vpop.xlane.xlu0 %345
      %vm347 = vcmask 7168
      %348 = vst.msk [vmem:[%s202] sm:$0xff] %vm347, %v340
      %349 = vst.msk [vmem:[%s202 + $0x8] sm:$0xff] %vm347, %v342
      %350 = vst.msk [vmem:[%s202 + $0x10] sm:$0xff] %vm347, %v344
      %351 = vst.msk [vmem:[%s202 + $0x18] sm:$0xff] %vm347, %v346
      %v352 = vmul.f32 %v321, %v321
      %v353 = vmul.f32 %v326, %v326
      %v354 = vmul.f32 %v331, %v331
      %v355 = vmul.f32 %v336, %v336
      %356 = vadd.xlane.f32.xlu0 %v352
      %v357 = vpop.xlane.xlu0 %356
      %358 = vadd.xlane.f32.xlu0 %v353
      %v359 = vpop.xlane.xlu0 %358
      %360 = vadd.xlane.f32.xlu0 %v354
      %v361 = vpop.xlane.xlu0 %360
      %362 = vadd.xlane.f32.xlu0 %v355
      %v363 = vpop.xlane.xlu0 %362
      %364 = vst.msk [vmem:[%s207] sm:$0xff] %vm347, %v357
      %365 = vst.msk [vmem:[%s207 + $0x8] sm:$0xff] %vm347, %v359
      %366 = vst.msk [vmem:[%s207 + $0x10] sm:$0xff] %vm347, %v361
      %367 = vst.msk [vmem:[%s207 + $0x18] sm:$0xff] %vm347, %v363
      %p368 = scmp.lt.s32.totalorder %s16, 3
      %s369 = scalar_select %p368, %s16, 3
      %s370 = smul.addr %s369, 4
      %s371 = smul.addr %s370, 8
      %s372 = scalar_lea.vmem %s3, %s371
      %p373 = scmp.lt.s32.totalorder %s16, 3
      %s374 = scalar_select %p373, %s16, 3
      %s375 = smul.addr %s374, 4
      %s376 = smul.addr %s375, 8
      %s377 = scalar_lea.vmem %s4, %s376
      // Predicated region
      $region33: #{res_stack_forward.3} parent=31 // pred_check
        %p378 = pneg %p102
      $region34: #{res_stack_forward.3} parent=31 // pred_check_branch
        %380 = sbr.rel (%p378) target = $region36
      $region35: #{res_stack_forward.3} parent=31 // pred_region
        _
      $region36: #{res_stack_forward.3} parent=31 // pred_fallthru
        _
      // Predicated region
      $region37: #{res_stack_forward.3} parent=31 // pred_check
        %p381 = pneg %p128
      $region38: #{res_stack_forward.3} parent=31 // pred_check_branch
        %383 = sbr.rel (%p381) target = $region40
      $region39: #{res_stack_forward.3} parent=31 // pred_region
        _
      $region40: #{res_stack_forward.3} parent=31 // pred_fallthru
        _
    $region32: #{res_stack_forward.3} parent=5 // pred_fallthru
      _
    %p384 = scmp.le.s32.totalorder 2, %s11
    // Predicated region
    $region41: #{res_stack_forward.3} parent=5 // pred_check
      %p385 = pneg %p384
    $region42: #{res_stack_forward.3} parent=5 // pred_check_branch
      %387 = sbr.rel (%p385) target = $region44
    $region43: #{res_stack_forward.3} parent=5 // pred_region
      %s388 = ssub.s32 %s11, 2
      // Predicated region
      $region45: #{res_stack_forward.3} parent=43 // pred_check
        %p389 = pneg %p108
      $region46: #{res_stack_forward.3} parent=43 // pred_check_branch
        %391 = sbr.rel (%p389) target = $region48
      $region47: #{res_stack_forward.3} parent=43 // pred_region
        %p392 = scmp.lt.s32.totalorder %s17, 3
        %s393 = scalar_select %p392, %s17, 3
        %s394 = smul.addr %s393, 4
        %s395 = smul.addr %s394, 8
        %s396 = scalar_lea.vmem %s3, %s395
      $region48: #{res_stack_forward.3} parent=43 // pred_fallthru
        _
      // Predicated region
      $region49: #{res_stack_forward.3} parent=43 // pred_check
        %p397 = pneg %p134
      $region50: #{res_stack_forward.3} parent=43 // pred_check_branch
        %399 = sbr.rel (%p397) target = $region52
      $region51: #{res_stack_forward.3} parent=43 // pred_region
        %p400 = scmp.lt.s32.totalorder %s17, 3
        %s401 = scalar_select %p400, %s17, 3
        %s402 = smul.addr %s401, 4
        %s403 = smul.addr %s402, 8
        %s404 = scalar_lea.vmem %s4, %s403
      $region52: #{res_stack_forward.3} parent=43 // pred_fallthru
        _
    $region44: #{res_stack_forward.3} parent=5 // pred_fallthru
      _
  $region6: #{res_stack_forward.3} parent=0 // loop_footer
    %s15 = sadd.s32 1, %s11
  $region7: #{res_stack_forward.3} parent=0 // loop_footer_branch
    %10 = sbr.rel target = $region3
  $region8: #{res_stack_forward.3} parent=0 // loop_exit
    _

// kernel: res_stack_forward.4
$region0: #{res_stack_forward.4}
  #allocation0 [shape = 'u32[]', space=smem, size = 0x4, offset = 0x4, fixed_abs, tag = 'smem constant byte address 0x4 - core index']
  #allocation1 [shape = 'u32[144,128]{1,0:T(1,128)}', space=vmem, size = 0x12000, scoped, tag = 'internal scratch']
  %s0 = inlined_call_operand.vmem [shape: f32[4,4,128], index: 0, kind: input, shape index: {}]
  %s1 = inlined_call_operand.vmem [shape: f32[32,4], index: 1, kind: input, shape index: {}]
  %s2 = inlined_call_operand.vmem [shape: f32[32,1], index: 2, kind: input, shape index: {}]
  %s3 = inlined_call_operand.vmem [shape: f32[32,1], index: 3, kind: input, shape index: {}]
  %s4 = inlined_call_operand.vmem [shape: f32[32,1], index: 4, kind: input, shape index: {}]
  %s5 = inlined_call_operand.vmem [shape: f32[32,96], index: 5, kind: input, shape index: {}]
  %s6 = inlined_call_operand.vmem [shape: f32[32,1], index: 6, kind: input, shape index: {}]
  %s7 = inlined_call_operand.vmem [shape: f32[4,32,128], index: 7, kind: output, shape index: {0}]
  %s8 = inlined_call_operand.vmem [shape: f32[4,32,1], index: 8, kind: output, shape index: {1}]
  %s9 = inlined_call_operand.vmem [shape: f32[4,32,1], index: 9, kind: output, shape index: {2}]
  %10 = xla_tuple %s7, %s8, %s9
  %s11 = sld [smem:[#allocation0]]
  $region77: #{res_stack_forward.4} parent=0
    _
  %s13 = ssub.s32 1, %s11
  %s14 = scalar_select 0, %s13, %s11
  loop: start=0, step=1, limit=6
  $region2: #{res_stack_forward.4} parent=0 // loop_pre_header
    _
  $region3: #{res_stack_forward.4} parent=0 // loop_header
    %s16 = sphi 0, %s20
    %p17 = scmp.ge.s32.totalorder %s16, 6
    %s26 = sphi 0, %s28
    %s29 = sphi 0, %s26
    %s30 = sphi 0, %s29
    %s46 = sphi 0, %s30
    %s50 = sphi 0, %s50
    %s52 = sphi 0, %s50
    %s53 = sphi 0, %s52
    %s67 = sphi 0, %s53
    %s71 = sphi 0, %s71
    %s73 = sphi 0, %s71
    %s74 = sphi 0, %s73
    %s88 = sphi 0, %s74
    %s92 = sphi 0, %s92
    %s94 = sphi 0, %s92
    %s95 = sphi 0, %s94
    %s109 = sphi 0, %s95
    %s113 = sphi 0, %s113
    %s115 = sphi 0, %s113
    %s116 = sphi 0, %s115
    %s130 = sphi 0, %s116
    %s134 = sphi 0, %s134
    %s136 = sphi 0, %s134
    %s137 = sphi 0, %s136
    %s151 = sphi 0, %s137
    %s155 = sphi 0, %s155
    %s157 = sphi 0, %s155
    %s158 = sphi 0, %s157
    %s172 = sphi 0, %s158
    %s178 = sphi 0, %s180
    %s181 = sphi 0, %s178
    %s182 = sphi 0, %s181
    %s198 = sphi 0, %s182
    %s204 = sphi 0, %s206
    %s207 = sphi 0, %s204
    %s208 = sphi 0, %s207
    %s224 = sphi 0, %s208
    %s230 = sphi 0, %s232
    %s233 = sphi 0, %s230
    %s234 = sphi 0, %s233
    %s250 = sphi 0, %s234
  $region4: #{res_stack_forward.4} parent=0 // loop_header_branch
    %19 = sbr.rel (%p17) target = $region8
  $region5: #{res_stack_forward.4} parent=0 // loop_body
    %s21 = ssub.s32 %s16, 1
    %s22 = ssub.s32 %s16, 2
    %s23 = sadd.s32 %s16, 1
    %s24 = ssub.s32 %s16, %s23
    %p25 = scmp.eq.s32.totalorder %s24, 0
    %s27 = sadd.s32 %s26, 1
    %s28 = scalar_select %p25, %s26, %s27
    %p31 = pneg %p25
    %p32 = scmp.eq.s32.totalorder %s16, 3
    %p33 = por %p31, %p32
    %p34 = scmp.ne.s32.totalorder %s26, %s29
    %p35 = scmp.eq.s32.totalorder %s16, 0
    %p36 = por %p34, %p35
    %p37 = scmp.ne.s32.totalorder %s26, %s29
    %p38 = scmp.eq.s32.totalorder %s21, 3
    %p39 = por %p37, %p38
    %p40 = scmp.ne.s32.totalorder %s29, %s30
    %p41 = scmp.eq.s32.totalorder %s21, 0
    %p42 = por %p40, %p41
    %p43 = scmp.ne.s32.totalorder %s29, %s30
    %p44 = scmp.eq.s32.totalorder %s22, 3
    %p45 = por %p43, %p44
    %p47 = scmp.ne.s32.totalorder %s30, %s46
    %p48 = scmp.eq.s32.totalorder %s22, 0
    %p49 = por %p47, %p48
    %s51 = sadd.s32 %s50, 1
    %p54 = scmp.eq.s32.totalorder %s16, 3
    %p55 = scmp.ne.s32.totalorder %s50, %s52
    %p56 = scmp.eq.s32.totalorder %s16, 0
    %p57 = por %p55, %p56
    %p58 = scmp.ne.s32.totalorder %s50, %s52
    %p59 = scmp.eq.s32.totalorder %s21, 3
    %p60 = por %p58, %p59
    %p61 = scmp.ne.s32.totalorder %s52, %s53
    %p62 = scmp.eq.s32.totalorder %s21, 0
    %p63 = por %p61, %p62
    %p64 = scmp.ne.s32.totalorder %s52, %s53
    %p65 = scmp.eq.s32.totalorder %s22, 3
    %p66 = por %p64, %p65
    %p68 = scmp.ne.s32.totalorder %s53, %s67
    %p69 = scmp.eq.s32.totalorder %s22, 0
    %p70 = por %p68, %p69
    %s72 = sadd.s32 %s71, 1
    %p75 = scmp.eq.s32.totalorder %s16, 3
    %p76 = scmp.ne.s32.totalorder %s71, %s73
    %p77 = scmp.eq.s32.totalorder %s16, 0
    %p78 = por %p76, %p77
    %p79 = scmp.ne.s32.totalorder %s71, %s73
    %p80 = scmp.eq.s32.totalorder %s21, 3
    %p81 = por %p79, %p80
    %p82 = scmp.ne.s32.totalorder %s73, %s74
    %p83 = scmp.eq.s32.totalorder %s21, 0
    %p84 = por %p82, %p83
    %p85 = scmp.ne.s32.totalorder %s73, %s74
    %p86 = scmp.eq.s32.totalorder %s22, 3
    %p87 = por %p85, %p86
    %p89 = scmp.ne.s32.totalorder %s74, %s88
    %p90 = scmp.eq.s32.totalorder %s22, 0
    %p91 = por %p89, %p90
    %s93 = sadd.s32 %s92, 1
    %p96 = scmp.eq.s32.totalorder %s16, 3
    %p97 = scmp.ne.s32.totalorder %s92, %s94
    %p98 = scmp.eq.s32.totalorder %s16, 0
    %p99 = por %p97, %p98
    %p100 = scmp.ne.s32.totalorder %s92, %s94
    %p101 = scmp.eq.s32.totalorder %s21, 3
    %p102 = por %p100, %p101
    %p103 = scmp.ne.s32.totalorder %s94, %s95
    %p104 = scmp.eq.s32.totalorder %s21, 0
    %p105 = por %p103, %p104
    %p106 = scmp.ne.s32.totalorder %s94, %s95
    %p107 = scmp.eq.s32.totalorder %s22, 3
    %p108 = por %p106, %p107
    %p110 = scmp.ne.s32.totalorder %s95, %s109
    %p111 = scmp.eq.s32.totalorder %s22, 0
    %p112 = por %p110, %p111
    %s114 = sadd.s32 %s113, 1
    %p117 = scmp.eq.s32.totalorder %s16, 3
    %p118 = scmp.ne.s32.totalorder %s113, %s115
    %p119 = scmp.eq.s32.totalorder %s16, 0
    %p120 = por %p118, %p119
    %p121 = scmp.ne.s32.totalorder %s113, %s115
    %p122 = scmp.eq.s32.totalorder %s21, 3
    %p123 = por %p121, %p122
    %p124 = scmp.ne.s32.totalorder %s115, %s116
    %p125 = scmp.eq.s32.totalorder %s21, 0
    %p126 = por %p124, %p125
    %p127 = scmp.ne.s32.totalorder %s115, %s116
    %p128 = scmp.eq.s32.totalorder %s22, 3
    %p129 = por %p127, %p128
    %p131 = scmp.ne.s32.totalorder %s116, %s130
    %p132 = scmp.eq.s32.totalorder %s22, 0
    %p133 = por %p131, %p132
    %s135 = sadd.s32 %s134, 1
    %p138 = scmp.eq.s32.totalorder %s16, 3
    %p139 = scmp.ne.s32.totalorder %s134, %s136
    %p140 = scmp.eq.s32.totalorder %s16, 0
    %p141 = por %p139, %p140
    %p142 = scmp.ne.s32.totalorder %s134, %s136
    %p143 = scmp.eq.s32.totalorder %s21, 3
    %p144 = por %p142, %p143
    %p145 = scmp.ne.s32.totalorder %s136, %s137
    %p146 = scmp.eq.s32.totalorder %s21, 0
    %p147 = por %p145, %p146
    %p148 = scmp.ne.s32.totalorder %s136, %s137
    %p149 = scmp.eq.s32.totalorder %s22, 3
    %p150 = por %p148, %p149
    %p152 = scmp.ne.s32.totalorder %s137, %s151
    %p153 = scmp.eq.s32.totalorder %s22, 0
    %p154 = por %p152, %p153
    %s156 = sadd.s32 %s155, 1
    %p159 = scmp.eq.s32.totalorder %s16, 3
    %p160 = scmp.ne.s32.totalorder %s155, %s157
    %p161 = scmp.eq.s32.totalorder %s16, 0
    %p162 = por %p160, %p161
    %p163 = scmp.ne.s32.totalorder %s155, %s157
    %p164 = scmp.eq.s32.totalorder %s21, 3
    %p165 = por %p163, %p164
    %p166 = scmp.ne.s32.totalorder %s157, %s158
    %p167 = scmp.eq.s32.totalorder %s21, 0
    %p168 = por %p166, %p167
    %p169 = scmp.ne.s32.totalorder %s157, %s158
    %p170 = scmp.eq.s32.totalorder %s22, 3
    %p171 = por %p169, %p170
    %p173 = scmp.ne.s32.totalorder %s158, %s172
    %p174 = scmp.eq.s32.totalorder %s22, 0
    %p175 = por %p173, %p174
    %s176 = ssub.s32 %s16, %s23
    %p177 = scmp.eq.s32.totalorder %s176, 0
    %s179 = sadd.s32 %s178, 1
    %s180 = scalar_select %p177, %s178, %s179
    %p183 = pneg %p177
    %p184 = scmp.eq.s32.totalorder %s16, 3
    %p185 = por %p183, %p184
    %p186 = scmp.ne.s32.totalorder %s178, %s181
    %p187 = scmp.eq.s32.totalorder %s16, 0
    %p188 = por %p186, %p187
    %p189 = scmp.ne.s32.totalorder %s178, %s181
    %p190 = scmp.eq.s32.totalorder %s21, 3
    %p191 = por %p189, %p190
    %p192 = scmp.ne.s32.totalorder %s181, %s182
    %p193 = scmp.eq.s32.totalorder %s21, 0
    %p194 = por %p192, %p193
    %p195 = scmp.ne.s32.totalorder %s181, %s182
    %p196 = scmp.eq.s32.totalorder %s22, 3
    %p197 = por %p195, %p196
    %p199 = scmp.ne.s32.totalorder %s182, %s198
    %p200 = scmp.eq.s32.totalorder %s22, 0
    %p201 = por %p199, %p200
    %s202 = ssub.s32 %s16, %s23
    %p203 = scmp.eq.s32.totalorder %s202, 0
    %s205 = sadd.s32 %s204, 1
    %s206 = scalar_select %p203, %s204, %s205
    %p209 = pneg %p203
    %p210 = scmp.eq.s32.totalorder %s16, 3
    %p211 = por %p209, %p210
    %p212 = scmp.ne.s32.totalorder %s204, %s207
    %p213 = scmp.eq.s32.totalorder %s16, 0
    %p214 = por %p212, %p213
    %p215 = scmp.ne.s32.totalorder %s204, %s207
    %p216 = scmp.eq.s32.totalorder %s21, 3
    %p217 = por %p215, %p216
    %p218 = scmp.ne.s32.totalorder %s207, %s208
    %p219 = scmp.eq.s32.totalorder %s21, 0
    %p220 = por %p218, %p219
    %p221 = scmp.ne.s32.totalorder %s207, %s208
    %p222 = scmp.eq.s32.totalorder %s22, 3
    %p223 = por %p221, %p222
    %p225 = scmp.ne.s32.totalorder %s208, %s224
    %p226 = scmp.eq.s32.totalorder %s22, 0
    %p227 = por %p225, %p226
    %s228 = ssub.s32 %s16, %s23
    %p229 = scmp.eq.s32.totalorder %s228, 0
    %s231 = sadd.s32 %s230, 1
    %s232 = scalar_select %p229, %s230, %s231
    %p235 = pneg %p229
    %p236 = scmp.eq.s32.totalorder %s16, 3
    %p237 = por %p235, %p236
    %p238 = scmp.ne.s32.totalorder %s230, %s233
    %p239 = scmp.eq.s32.totalorder %s16, 0
    %p240 = por %p238, %p239
    %p241 = scmp.ne.s32.totalorder %s230, %s233
    %p242 = scmp.eq.s32.totalorder %s21, 3
    %p243 = por %p241, %p242
    %p244 = scmp.ne.s32.totalorder %s233, %s234
    %p245 = scmp.eq.s32.totalorder %s21, 0
    %p246 = por %p244, %p245
    %p247 = scmp.ne.s32.totalorder %s233, %s234
    %p248 = scmp.eq.s32.totalorder %s22, 3
    %p249 = por %p247, %p248
    %p251 = scmp.ne.s32.totalorder %s234, %s250
    %p252 = scmp.eq.s32.totalorder %s22, 0
    %p253 = por %p251, %p252
    %p254 = scmp.le.s32.totalorder 1, %s16
    %p255 = scmp.lt.s32.totalorder %s16, 5
    %p256 = pnand %p254, %p255
    %p257 = pneg %p256
    // Predicated region
    $region9: #{res_stack_forward.4} parent=5 // pred_check
      _
    $region10: #{res_stack_forward.4} parent=5 // pred_check_branch
      %259 = sbr.rel (%p256) target = $region12
    $region11: #{res_stack_forward.4} parent=5 // pred_region
      %s260 = ssub.s32 %s16, 1
      // Predicated region
      $region13: #{res_stack_forward.4} parent=11 // pred_check
        %p261 = pneg %p63
      $region14: #{res_stack_forward.4} parent=11 // pred_check_branch
        %263 = sbr.rel (%p261) target = $region16
      $region15: #{res_stack_forward.4} parent=11 // pred_region
        _
      $region16: #{res_stack_forward.4} parent=11 // pred_fallthru
        _
      // Predicated region
      $region17: #{res_stack_forward.4} parent=11 // pred_check
        %p264 = pneg %p84
      $region18: #{res_stack_forward.4} parent=11 // pred_check_branch
        %266 = sbr.rel (%p264) target = $region20
      $region19: #{res_stack_forward.4} parent=11 // pred_region
        _
      $region20: #{res_stack_forward.4} parent=11 // pred_fallthru
        _
      // Predicated region
      $region21: #{res_stack_forward.4} parent=11 // pred_check
        %p267 = pneg %p105
      $region22: #{res_stack_forward.4} parent=11 // pred_check_branch
        %269 = sbr.rel (%p267) target = $region24
      $region23: #{res_stack_forward.4} parent=11 // pred_region
        _
      $region24: #{res_stack_forward.4} parent=11 // pred_fallthru
        _
      // Predicated region
      $region25: #{res_stack_forward.4} parent=11 // pred_check
        %p270 = pneg %p126
      $region26: #{res_stack_forward.4} parent=11 // pred_check_branch
        %272 = sbr.rel (%p270) target = $region28
      $region27: #{res_stack_forward.4} parent=11 // pred_region
        _
      $region28: #{res_stack_forward.4} parent=11 // pred_fallthru
        _
      // Predicated region
      $region29: #{res_stack_forward.4} parent=11 // pred_check
        %p273 = pneg %p147
      $region30: #{res_stack_forward.4} parent=11 // pred_check_branch
        %275 = sbr.rel (%p273) target = $region32
      $region31: #{res_stack_forward.4} parent=11 // pred_region
        _
      $region32: #{res_stack_forward.4} parent=11 // pred_fallthru
        _
      // Predicated region
      $region33: #{res_stack_forward.4} parent=11 // pred_check
        %p276 = pneg %p168
      $region34: #{res_stack_forward.4} parent=11 // pred_check_branch
        %278 = sbr.rel (%p276) target = $region36
      $region35: #{res_stack_forward.4} parent=11 // pred_region
        _
      $region36: #{res_stack_forward.4} parent=11 // pred_fallthru
        _
    $region12: #{res_stack_forward.4} parent=5 // pred_fallthru
      _
    %p279 = scmp.lt.s32.totalorder %s16, 4
    // Predicated region
    $region37: #{res_stack_forward.4} parent=5 // pred_check
      %p280 = pneg %p279
    $region38: #{res_stack_forward.4} parent=5 // pred_check_branch
      %282 = sbr.rel (%p280) target = $region40
    $region39: #{res_stack_forward.4} parent=5 // pred_region
      // Predicated region
      $region41: #{res_stack_forward.4} parent=39 // pred_check
        %p283 = pneg %p36
      $region42: #{res_stack_forward.4} parent=39 // pred_check_branch
        %285 = sbr.rel (%p283) target = $region44
      $region43: #{res_stack_forward.4} parent=39 // pred_region
        %p286 = scmp.lt.s32.totalorder %s16, 3
        %s287 = scalar_select %p286, %s16, 3
        %s288 = smul.addr %s287, 4
        %s289 = scalar_lea.vmem %s0, %s288
      $region44: #{res_stack_forward.4} parent=39 // pred_fallthru
        _
    $region40: #{res_stack_forward.4} parent=5 // pred_fallthru
      _
    %p290 = scmp.le.s32.totalorder 1, %s16
    %p291 = scmp.lt.s32.totalorder %s16, 5
    %p292 = pnand %p290, %p291
    %p293 = pneg %p292
    // Predicated region
    $region45: #{res_stack_forward.4} parent=5 // pred_check
      _
    $region46: #{res_stack_forward.4} parent=5 // pred_check_branch
      %295 = sbr.rel (%p292) target = $region48
    $region47: #{res_stack_forward.4} parent=5 // pred_region
      %s296 = ssub.s32 %s16, 1
      %p297 = scmp.lt.s32.totalorder %s21, 3
      %s298 = scalar_select %p297, %s21, 3
      %s299 = smul.addr %s298, 4
      %s300 = scalar_lea.vmem %s0, %s299
      %p301 = pneg %p42
      %p302 = pneg %p39
      %p303 = pneg %p63
      %p304 = pneg %p60
      %p305 = pneg %p84
      %p306 = pneg %p81
      %p307 = pneg %p105
      %p308 = pneg %p102
      %p309 = pneg %p126
      %p310 = pneg %p123
      %p311 = pneg %p147
      %p312 = pneg %p144
      %p313 = pneg %p168
      %p314 = pneg %p165
      %p315 = pneg %p194
      %p316 = pneg %p191
      %p317 = scmp.lt.s32.totalorder %s21, 3
      %s318 = scalar_select %p317, %s21, 3
      %s319 = smul.addr %s318, 4
      %s320 = smul.addr %s319, 8
      %s321 = scalar_lea.vmem %s7, %s320
      %p322 = pneg %p220
      %p323 = pneg %p217
      %p324 = scmp.lt.s32.totalorder %s21, 3
      %s325 = scalar_select %p324, %s21, 3
      %s326 = smul.addr %s325, 4
      %s327 = smul.addr %s326, 8
      %s328 = scalar_lea.vmem %s8, %s327
      %p329 = pneg %p246
      %p330 = pneg %p243
      %p331 = scmp.lt.s32.totalorder %s21, 3
      %s332 = scalar_select %p331, %s21, 3
      %s333 = smul.addr %s332, 4
      %s334 = smul.addr %s333, 8
      %s335 = scalar_lea.vmem %s9, %s334
      %p336 = scmp.lt.s32.totalorder %s21, 3
      %s337 = scalar_select %p336, %s21, 3
      %s338 = smul.addr %s337, 4
      %s339 = scalar_lea.vmem %s0, %s338
      %p340 = scmp.lt.s32.totalorder %s21, 3
      %s341 = scalar_select %p340, %s21, 3
      %s342 = smul.addr %s341, 4
      %s343 = smul.addr %s342, 8
      %s344 = scalar_lea.vmem %s7, %s343
      %p345 = scmp.lt.s32.totalorder %s21, 3
      %s346 = scalar_select %p345, %s21, 3
      %s347 = smul.addr %s346, 4
      %s348 = smul.addr %s347, 8
      %s349 = scalar_lea.vmem %s8, %s348
      %p350 = scmp.lt.s32.totalorder %s21, 3
      %s351 = scalar_select %p350, %s21, 3
      %s352 = smul.addr %s351, 4
      %s353 = smul.addr %s352, 8
      %s354 = scalar_lea.vmem %s9, %s353
      %v355 = vld [vmem:[%s1] sm:$0xff]
      %v356 = vld [vmem:[%s1 + $0x8] sm:$0xff]
      %v357 = vld [vmem:[%s1 + $0x10] sm:$0xff]
      %v358 = vld [vmem:[%s1 + $0x18] sm:$0xff]
      %v359 = vld [vmem:[%s339] sm:$0xf]
      %v360 = vld [vmem:[%s2] sm:$0xff]
      %v361 = vld [vmem:[%s2 + $0x8] sm:$0xff]
      %v362 = vld [vmem:[%s2 + $0x10] sm:$0xff]
      %v363 = vld [vmem:[%s2 + $0x18] sm:$0xff]
      %365 = vset.pattern.permute.xlu0 0
      %366 = vperm.xlu0 %365, %v360
      %v367 = vpop.permute.xlu0 %366
      %370 = vset.pattern.permute.xlu0 0
      %371 = vperm.xlu0 %370, %v361
      %v372 = vpop.permute.xlu0 %371
      %375 = vset.pattern.permute.xlu0 0
      %376 = vperm.xlu0 %375, %v362
      %v377 = vpop.permute.xlu0 %376
      %380 = vset.pattern.permute.xlu0 0
      %381 = vperm.xlu0 %380, %v363
      %v382 = vpop.permute.xlu0 %381
      %vm384 = vcmask 31744
      %v386 = vsel %vm384, %v355, 0
      %v389 = vsel %vm384, %v356, 0
      %v392 = vsel %vm384, %v357, 0
      %v395 = vsel %vm384, %v358, 0
      %vm397 = vcmask 1043456
      %v399 = vsel %vm397, %v359, 0
      %401 = vmatprep.subr.mxu0 0.0
      %402 = vmatpush1.msra.mxu0 %v399
      %403 = vmatprep.subr.mxu0 0.0
      %404 = vmatpush1.msra.mxu0 0.0
      %405 = vmatprep.subr.mxu0 0.0
      %406 = vmatpush1.msra.mxu0 0.0
      %407 = vmatprep.subr.mxu0 0.0
      %408 = vmatpush1.msra.mxu0 0.0
      %409 = vmatprep.subr.mxu0 0.0
      %410 = vmatpush1.msra.mxu0 0.0
      %411 = vmatprep.subr.mxu0 0.0
      %412 = vmatpush1.msra.mxu0 0.0
      %413 = vmatprep.subr.mxu0 0.0
      %414 = vmatpush1.msra.mxu0 0.0
      %415 = vmatprep.subr.mxu0 0.0
      %416 = vmatpush1.msra.mxu0 0.0
      %417 = vmatprep.subr.mxu0 0.0
      %418 = vmatpush1.msra.mxu0 0.0
      %419 = vmatprep.subr.mxu0 0.0
      %420 = vmatpush1.msra.mxu0 0.0
      %421 = vmatprep.subr.mxu0 0.0
      %422 = vmatpush1.msra.mxu0 0.0
      %423 = vmatprep.subr.mxu0 0.0
      %424 = vmatpush1.msra.mxu0 0.0
      %425 = vmatprep.subr.mxu0 0.0
      %426 = vmatpush1.msra.mxu0 0.0
      %427 = vmatprep.subr.mxu0 0.0
      %428 = vmatpush1.msra.mxu0 0.0
      %429 = vmatprep.subr.mxu0 0.0
      %430 = vmatpush1.msra.mxu0 0.0
      %431 = vmatprep.subr.mxu0 0.0
      %432 = vmatpush1.msra.mxu0 0.0
      %433 = vmatprep.subr.mxu0 0.0
      %434 = vmatpush1.msra.mxu0 0.0
      %435 = vmatprep.subr.mxu0 0.0
      %436 = vmatpush1.msra.mxu0 0.0
      %437 = vmatprep.subr.mxu0 0.0
      %438 = vmatpush1.msra.mxu0 0.0
      %439 = vmatprep.subr.mxu0 0.0
      %440 = vmatpush1.msra.mxu0 0.0
      %441 = vmatprep.subr.mxu0 0.0
      %442 = vmatpush1.msra.mxu0 0.0
      %443 = vmatprep.subr.mxu0 0.0
      %444 = vmatpush1.msra.mxu0 0.0
      %445 = vmatprep.subr.mxu0 0.0
      %446 = vmatpush1.msra.mxu0 0.0
      %447 = vmatprep.subr.mxu0 0.0
      %448 = vmatpush1.msra.mxu0 0.0
      %449 = vmatprep.subr.mxu0 0.0
      %450 = vmatpush1.msra.mxu0 0.0
      %451 = vmatprep.subr.mxu0 0.0
      %452 = vmatpush1.msra.mxu0 0.0
      %453 = vmatprep.subr.mxu0 0.0
      %454 = vmatpush1.msra.mxu0 0.0
      %455 = vmatprep.subr.mxu0 0.0
      %456 = vmatpush1.msra.mxu0 0.0
      %457 = vmatprep.subr.mxu0 0.0
      %458 = vmatpush1.msra.mxu0 0.0
      %459 = vmatprep.subr.mxu0 0.0
      %460 = vmatpush1.msra.mxu0 0.0
      %461 = vmatprep.subr.mxu0 0.0
      %462 = vmatpush1.msra.mxu0 0.0
      %463 = vmatprep.subr.mxu0 0.0
      %464 = vmatpush1.msra.mxu0 0.0
      %465 = vmatprep.mubr.f32.mxu0 0.0
      %466 = vmatmul.mubr.f32.gmra.mrb[0].mxu0 %v386
      %v467 = vpop.f32.mrb[0].mxu0
      %v468 = vadd.f32 %v367, %v467
      %v469 = vpop.f32.mrb[0].mxu0
      %470 = vmatprep.mubr.f32.mxu0 0.0
      %471 = vmatmul.mubr.f32.gmra.mrb[0].mxu0 %v389
      %v472 = vpop.f32.mrb[0].mxu0
      %v473 = vadd.f32 %v372, %v472
      %v474 = vpop.f32.mrb[0].mxu0
      %475 = vmatprep.mubr.f32.mxu0 0.0
      %476 = vmatmul.mubr.f32.gmra.mrb[0].mxu0 %v392
      %v477 = vpop.f32.mrb[0].mxu0
      %v478 = vadd.f32 %v377, %v477
      %v479 = vpop.f32.mrb[0].mxu0
      %480 = vmatprep.mubr.f32.mxu0 0.0
      %481 = vmatmul.mubr.f32.gmra.mrb[0].mxu0 %v395
      %v482 = vpop.f32.mrb[0].mxu0
      %v483 = vadd.f32 %v382, %v482
      %v484 = vpop.f32.mrb[0].mxu0
      %485 = vdwg.mxu0
      %v486 = vld [vmem:[%s3] sm:$0xff]
      %v487 = vld [vmem:[%s3 + $0x8] sm:$0xff]
      %v488 = vld [vmem:[%s3 + $0x10] sm:$0xff]
      %v489 = vld [vmem:[%s3 + $0x18] sm:$0xff]
      %v490 = vld [vmem:[%s4] sm:$0xff]
      %v491 = vld [vmem:[%s4 + $0x8] sm:$0xff]
      %v492 = vld [vmem:[%s4 + $0x10] sm:$0xff]
      %v493 = vld [vmem:[%s4 + $0x18] sm:$0xff]
      %v494 = vld [vmem:[%s5] sm:$0xff]
      %v495 = vld [vmem:[%s5 + $0x8] sm:$0xff]
      %v496 = vld [vmem:[%s5 + $0x10] sm:$0xff]
      %v497 = vld [vmem:[%s5 + $0x18] sm:$0xff]
      %v498 = vld [vmem:[%s6] sm:$0xff]
      %v499 = vld [vmem:[%s6 + $0x8] sm:$0xff]
      %v500 = vld [vmem:[%s6 + $0x10] sm:$0xff]
      %v501 = vld [vmem:[%s6 + $0x18] sm:$0xff]
      %503 = vset.pattern.permute.xlu0 0
      %504 = vperm.xlu0 %503, %v486
      %v505 = vpop.permute.xlu0 %504
      %508 = vset.pattern.permute.xlu0 0
      %509 = vperm.xlu0 %508, %v487
      %v510 = vpop.permute.xlu0 %509
      %513 = vset.pattern.permute.xlu0 0
      %514 = vperm.xlu0 %513, %v488
      %v515 = vpop.permute.xlu0 %514
      %518 = vset.pattern.permute.xlu0 0
      %519 = vperm.xlu0 %518, %v489
      %v520 = vpop.permute.xlu0 %519
      %v522 = vmul.f32 %v468, %v505
      %v523 = vmul.f32 %v473, %v510
      %v524 = vmul.f32 %v478, %v515
      %v525 = vmul.f32 %v483, %v520
      %527 = vset.pattern.permute.xlu0 0
      %528 = vperm.xlu0 %527, %v490
      %v529 = vpop.permute.xlu0 %528
      %532 = vset.pattern.permute.xlu0 0
      %533 = vperm.xlu0 %532, %v491
      %v534 = vpop.permute.xlu0 %533
      %537 = vset.pattern.permute.xlu0 0
      %538 = vperm.xlu0 %537, %v492
      %v539 = vpop.permute.xlu0 %538
      %542 = vset.pattern.permute.xlu0 0
      %543 = vperm.xlu0 %542, %v493
      %v544 = vpop.permute.xlu0 %543
      %v546 = vadd.f32 %v522, %v529
      %v547 = vadd.f32 %v523, %v534
      %v548 = vadd.f32 %v524, %v539
      %v549 = vadd.f32 %v525, %v544
      %v550 = vlaneseq
      %v551 = vand.u32 %v550, 127
      %vm552 = vcmp.eq.s32.totalorder %v551, 0
      %553 = vrot.lane.b32.xlu0 %v546, 1
      %v554 = vpop.permute.xlu0 %553
      %555 = vrot.lane.b32.xlu0 %v547, 1
      %v556 = vpop.permute.xlu0 %555
      %557 = vrot.lane.b32.xlu0 %v548, 1
      %v558 = vpop.permute.xlu0 %557
      %559 = vrot.lane.b32.xlu0 %v549, 1
      %v560 = vpop.permute.xlu0 %559
      %v561 = vsel %vm552, 1, 0
      %vm562 = vcmp.eq.s32.totalorder %v561, 1
      %v563 = vsel %vm562, 0.0, %v554
      %v564 = vsel %vm562, 0.0, %v556
      %v565 = vsel %vm562, 0.0, %v558
      %v566 = vsel %vm562, 0.0, %v560
      %vm567 = vcmp.eq.s32.totalorder %v551, 127
      %568 = vrot.lane.b32.xlu0 %v546, 127
      %v569 = vpop.permute.xlu0 %568
      %570 = vrot.lane.b32.xlu0 %v547, 127
      %v571 = vpop.permute.xlu0 %570
      %572 = vrot.lane.b32.xlu0 %v548, 127
      %v573 = vpop.permute.xlu0 %572
      %574 = vrot.lane.b32.xlu0 %v549, 127
      %v575 = vpop.permute.xlu0 %574
      %v576 = vsel %vm567, 1, 0
      %vm577 = vcmp.eq.s32.totalorder %v576, 1
      %v578 = vsel %vm577, 0.0, %v569
      %v579 = vsel %vm577, 0.0, %v571
      %v580 = vsel %vm577, 0.0, %v573
      %v581 = vsel %vm577, 0.0, %v575
      %583 = vset.pattern.permute.xlu0 0
      %584 = vperm.xlu0 %583, %v498
      %v585 = vpop.permute.xlu0 %584
      %588 = vset.pattern.permute.xlu0 0
      %589 = vperm.xlu0 %588, %v499
      %v590 = vpop.permute.xlu0 %589
      %593 = vset.pattern.permute.xlu0 0
      %594 = vperm.xlu0 %593, %v500
      %v595 = vpop.permute.xlu0 %594
      %598 = vset.pattern.permute.xlu0 0
      %599 = vperm.xlu0 %598, %v501
      %v600 = vpop.permute.xlu0 %599
      %vm602 = vcmask 785408
      %v604 = vsel %vm602, %v494, 0
      %v607 = vsel %vm602, %v495, 0
      %v610 = vsel %vm602, %v496, 0
      %v613 = vsel %vm602, %v497, 0
      %615 = vmatprep.subr.mxu0 0.0
      %616 = vmatpush1.msra.mxu0 %v563
      %617 = vmatprep.subr.mxu0 0.0
      %618 = vmatpush1.msra.mxu0 %v564
      %619 = vmatprep.subr.mxu0 0.0
      %620 = vmatpush1.msra.mxu0 %v565
      %621 = vmatprep.subr.mxu0 0.0
      %622 = vmatpush1.msra.mxu0 %v566
      %623 = vmatprep.subr.mxu0 0.0
      %624 = vmatpush1.msra.mxu0 %v546
      %625 = vmatprep.subr.mxu0 0.0
      %626 = vmatpush1.msra.mxu0 %v547
      %627 = vmatprep.subr.mxu0 0.0
      %628 = vmatpush1.msra.mxu0 %v548
      %629 = vmatprep.subr.mxu0 0.0
      %630 = vmatpush1.msra.mxu0 %v549
      %631 = vmatprep.subr.mxu0 0.0
      %632 = vmatpush1.msra.mxu0 %v578
      %633 = vmatprep.subr.mxu0 0.0
      %634 = vmatpush1.msra.mxu0 %v579
      %635 = vmatprep.subr.mxu0 0.0
      %636 = vmatpush1.msra.mxu0 %v580
      %637 = vmatprep.subr.mxu0 0.0
      %638 = vmatpush1.msra.mxu0 %v581
      %639 = vmatprep.subr.mxu0 0.0
      %640 = vmatpush1.msra.mxu0 0.0
      %641 = vmatprep.subr.mxu0 0.0
      %642 = vmatpush1.msra.mxu0 0.0
      %643 = vmatprep.subr.mxu0 0.0
      %644 = vmatpush1.msra.mxu0 0.0
      %645 = vmatprep.subr.mxu0 0.0
      %646 = vmatpush1.msra.mxu0 0.0
      %647 = vmatprep.subr.mxu0 0.0
      %648 = vmatpush1.msra.mxu0 0.0
      %649 = vmatprep.subr.mxu0 0.0
      %650 = vmatpush1.msra.mxu0 0.0
      %651 = vmatprep.subr.mxu0 0.0
      %652 = vmatpush1.msra.mxu0 0.0
      %653 = vmatprep.subr.mxu0 0.0
      %654 = vmatpush1.msra.mxu0 0.0
      %655 = vmatprep.subr.mxu0 0.0
      %656 = vmatpush1.msra.mxu0 0.0
      %657 = vmatprep.subr.mxu0 0.0
      %658 = vmatpush1.msra.mxu0 0.0
      %659 = vmatprep.subr.mxu0 0.0
      %660 = vmatpush1.msra.mxu0 0.0
      %661 = vmatprep.subr.mxu0 0.0
      %662 = vmatpush1.msra.mxu0 0.0
      %663 = vmatprep.subr.mxu0 0.0
      %664 = vmatpush1.msra.mxu0 0.0
      %665 = vmatprep.subr.mxu0 0.0
      %666 = vmatpush1.msra.mxu0 0.0
      %667 = vmatprep.subr.mxu0 0.0
      %668 = vmatpush1.msra.mxu0 0.0
      %669 = vmatprep.subr.mxu0 0.0
      %670 = vmatpush1.msra.mxu0 0.0
      %671 = vmatprep.subr.mxu0 0.0
      %672 = vmatpush1.msra.mxu0 0.0
      %673 = vmatprep.subr.mxu0 0.0
      %674 = vmatpush1.msra.mxu0 0.0
      %675 = vmatprep.subr.mxu0 0.0
      %676 = vmatpush1.msra.mxu0 0.0
      %677 = vmatprep.subr.mxu0 0.0
      %678 = vmatpush1.msra.mxu0 0.0
      %679 = vmatprep.mubr.f32.mxu0 0.0
      %680 = vmatmul.mubr.f32.gmra.mrb[0].mxu0 %v604
      %v681 = vpop.f32.mrb[0].mxu0
      %v682 = vadd.f32 %v585, %v681
      %v683 = vpop.f32.mrb[0].mxu0
      %684 = vmatprep.mubr.f32.mxu0 0.0
      %685 = vmatmul.mubr.f32.gmra.mrb[0].mxu0 %v607
      %v686 = vpop.f32.mrb[0].mxu0
      %v687 = vadd.f32 %v590, %v686
      %v688 = vpop.f32.mrb[0].mxu0
      %689 = vmatprep.mubr.f32.mxu0 0.0
      %690 = vmatmul.mubr.f32.gmra.mrb[0].mxu0 %v610
      %v691 = vpop.f32.mrb[0].mxu0
      %v692 = vadd.f32 %v595, %v691
      %v693 = vpop.f32.mrb[0].mxu0
      %694 = vmatprep.mubr.f32.mxu0 0.0
      %695 = vmatmul.mubr.f32.gmra.mrb[0].mxu0 %v613
      %v696 = vpop.f32.mrb[0].mxu0
      %v697 = vadd.f32 %v600, %v696
      %v698 = vpop.f32.mrb[0].mxu0
      %699 = vdwg.mxu0
      %v700 = vadd.f32 %v682, %v468
      %v701 = vadd.f32 %v687, %v473
      %v702 = vadd.f32 %v692, %v478
      %v703 = vadd.f32 %v697, %v483
      %v704 = vmax.f32 %v700, 0.0
      %v705 = vmax.f32 %v701, 0.0
      %v706 = vmax.f32 %v702, 0.0
      %v707 = vmax.f32 %v703, 0.0
      %708 = vst [vmem:[%s344] sm:$0xff] %v704
      %709 = vst [vmem:[%s344 + $0x8] sm:$0xff] %v705
      %710 = vst [vmem:[%s344 + $0x10] sm:$0xff] %v706
      %711 = vst [vmem:[%s344 + $0x18] sm:$0xff] %v707
      %712 = vadd.xlane.f32.xlu0 %v704
      %v713 = vpop.xlane.xlu0 %712
      %714 = vadd.xlane.f32.xlu0 %v705
      %v715 = vpop.xlane.xlu0 %714
      %716 = vadd.xlane.f32.xlu0 %v706
      %v717 = vpop.xlane.xlu0 %716
      %718 = vadd.xlane.f32.xlu0 %v707
      %v719 = vpop.xlane.xlu0 %718
      %vm720 = vcmask 7168
      %721 = vst.msk [vmem:[%s349] sm:$0xff] %vm720, %v713
      %722 = vst.msk [vmem:[%s349 + $0x8] sm:$0xff] %vm720, %v715
      %723 = vst.msk [vmem:[%s349 + $0x10] sm:$0xff] %vm720, %v717
      %724 = vst.msk [vmem:[%s349 + $0x18] sm:$0xff] %vm720, %v719
      %v725 = vmul.f32 %v704, %v704
      %v726 = vmul.f32 %v705, %v705
      %v727 = vmul.f32 %v706, %v706
      %v728 = vmul.f32 %v707, %v707
      %729 = vadd.xlane.f32.xlu0 %v725
      %v730 = vpop.xlane.xlu0 %729
      %731 = vadd.xlane.f32.xlu0 %v726
      %v732 = vpop.xlane.xlu0 %731
      %733 = vadd.xlane.f32.xlu0 %v727
      %v734 = vpop.xlane.xlu0 %733
      %735 = vadd.xlane.f32.xlu0 %v728
      %v736 = vpop.xlane.xlu0 %735
      %737 = vst.msk [vmem:[%s354] sm:$0xff] %vm720, %v730
      %738 = vst.msk [vmem:[%s354 + $0x8] sm:$0xff] %vm720, %v732
      %739 = vst.msk [vmem:[%s354 + $0x10] sm:$0xff] %vm720, %v734
      %740 = vst.msk [vmem:[%s354 + $0x18] sm:$0xff] %vm720, %v736
      %p741 = scmp.lt.s32.totalorder %s21, 3
      %s742 = scalar_select %p741, %s21, 3
      %s743 = smul.addr %s742, 4
      %s744 = smul.addr %s743, 8
      %s745 = scalar_lea.vmem %s7, %s744
      %p746 = scmp.lt.s32.totalorder %s21, 3
      %s747 = scalar_select %p746, %s21, 3
      %s748 = smul.addr %s747, 4
      %s749 = smul.addr %s748, 8
      %s750 = scalar_lea.vmem %s8, %s749
      %p751 = scmp.lt.s32.totalorder %s21, 3
      %s752 = scalar_select %p751, %s21, 3
      %s753 = smul.addr %s752, 4
      %s754 = smul.addr %s753, 8
      %s755 = scalar_lea.vmem %s9, %s754
      // Predicated region
      $region49: #{res_stack_forward.4} parent=47 // pred_check
        %p756 = pneg %p191
      $region50: #{res_stack_forward.4} parent=47 // pred_check_branch
        %758 = sbr.rel (%p756) target = $region52
      $region51: #{res_stack_forward.4} parent=47 // pred_region
        _
      $region52: #{res_stack_forward.4} parent=47 // pred_fallthru
        _
      // Predicated region
      $region53: #{res_stack_forward.4} parent=47 // pred_check
        %p759 = pneg %p217
      $region54: #{res_stack_forward.4} parent=47 // pred_check_branch
        %761 = sbr.rel (%p759) target = $region56
      $region55: #{res_stack_forward.4} parent=47 // pred_region
        _
      $region56: #{res_stack_forward.4} parent=47 // pred_fallthru
        _
      // Predicated region
      $region57: #{res_stack_forward.4} parent=47 // pred_check
        %p762 = pneg %p243
      $region58: #{res_stack_forward.4} parent=47 // pred_check_branch
        %764 = sbr.rel (%p762) target = $region60
      $region59: #{res_stack_forward.4} parent=47 // pred_region
        _
      $region60: #{res_stack_forward.4} parent=47 // pred_fallthru
        _
    $region48: #{res_stack_forward.4} parent=5 // pred_fallthru
      _
    %p765 = scmp.le.s32.totalorder 2, %s16
    // Predicated region
    $region61: #{res_stack_forward.4} parent=5 // pred_check
      %p766 = pneg %p765
    $region62: #{res_stack_forward.4} parent=5 // pred_check_branch
      %768 = sbr.rel (%p766) target = $region64
    $region63: #{res_stack_forward.4} parent=5 // pred_region
      %s769 = ssub.s32 %s16, 2
      // Predicated region
      $region65: #{res_stack_forward.4} parent=63 // pred_check
        %p770 = pneg %p197
      $region66: #{res_stack_forward.4} parent=63 // pred_check_branch
        %772 = sbr.rel (%p770) target = $region68
      $region67: #{res_stack_forward.4} parent=63 // pred_region
        %p773 = scmp.lt.s32.totalorder %s22, 3
        %s774 = scalar_select %p773, %s22, 3
        %s775 = smul.addr %s774, 4
        %s776 = smul.addr %s775, 8
        %s777 = scalar_lea.vmem %s7, %s776
      $region68: #{res_stack_forward.4} parent=63 // pred_fallthru
        _
      // Predicated region
      $region69: #{res_stack_forward.4} parent=63 // pred_check
        %p778 = pneg %p223
      $region70: #{res_stack_forward.4} parent=63 // pred_check_branch
        %780 = sbr.rel (%p778) target = $region72
      $region71: #{res_stack_forward.4} parent=63 // pred_region
        %p781 = scmp.lt.s32.totalorder %s22, 3
        %s782 = scalar_select %p781, %s22, 3
        %s783 = smul.addr %s782, 4
        %s784 = smul.addr %s783, 8
        %s785 = scalar_lea.vmem %s8, %s784
      $region72: #{res_stack_forward.4} parent=63 // pred_fallthru
        _
      // Predicated region
      $region73: #{res_stack_forward.4} parent=63 // pred_check
        %p786 = pneg %p249
      $region74: #{res_stack_forward.4} parent=63 // pred_check_branch
        %788 = sbr.rel (%p786) target = $region76
      $region75: #{res_stack_forward.4} parent=63 // pred_region
        %p789 = scmp.lt.s32.totalorder %s22, 3
        %s790 = scalar_select %p789, %s22, 3
        %s791 = smul.addr %s790, 4
        %s792 = smul.addr %s791, 8
        %s793 = scalar_lea.vmem %s9, %s792
      $region76: #{res_stack_forward.4} parent=63 // pred_fallthru
        _
    $region64: #{res_stack_forward.4} parent=5 // pred_fallthru
      _
  $region6: #{res_stack_forward.4} parent=0 // loop_footer
    %s20 = sadd.s32 1, %s16
  $region7: #{res_stack_forward.4} parent=0 // loop_footer_branch
    %15 = sbr.rel target = $region3
  $region8: #{res_stack_forward.4} parent=0 // loop_exit
    _

// kernel: res_stack_forward.5
$region0: #{res_stack_forward.5}
  #allocation0 [shape = 'u32[]', space=smem, size = 0x4, offset = 0x4, fixed_abs, tag = 'smem constant byte address 0x4 - core index']
  #allocation1 [shape = 'u32[144,128]{1,0:T(1,128)}', space=vmem, size = 0x12000, scoped, tag = 'internal scratch']
  %s0 = inlined_call_operand.vmem [shape: f32[4,32,128], index: 0, kind: input, shape index: {}]
  %s1 = inlined_call_operand.vmem [shape: f32[32,1], index: 1, kind: input, shape index: {}]
  %s2 = inlined_call_operand.vmem [shape: f32[32,1], index: 2, kind: input, shape index: {}]
  %s3 = inlined_call_operand.vmem [shape: f32[32,96], index: 3, kind: input, shape index: {}]
  %s4 = inlined_call_operand.vmem [shape: f32[32,1], index: 4, kind: input, shape index: {}]
  %s5 = inlined_call_operand.vmem [shape: f32[128,64], index: 5, kind: input, shape index: {}]
  %s6 = inlined_call_operand.hbm [shape: f32[4,32,64], index: 6, kind: output, shape index: {}]
  %s7 = sld [smem:[#allocation0]]
  $region57: #{res_stack_forward.5} parent=0
    _
  %s9 = ssub.s32 1, %s7
  %s10 = scalar_select 0, %s9, %s7
  $region1: #{res_stack_forward.5} parent=0
    #allocation2 [shape = 'u8[32768]{0}', space=vmem, size = 0x8000, scoped, tag = 'output window, operand 0']
    #allocation3 [shape = 's32[2]{0}', space=sflag, size = 0x8, scoped, tag = 'scoped memory for res_stack_forward.5']
    %11 = vsyncpa [#allocation3], 0
    %s12 = scalar_lea.sflag [#allocation3], 1
    %13 = vsyncpa %s12, 0
    loop: start=0, step=1, limit=6
    $region2: #{res_stack_forward.5} parent=1 // loop_pre_header
      _
    $region3: #{res_stack_forward.5} parent=1 // loop_header
      %s15 = sphi 0, %s19
      %p16 = scmp.ge.s32.totalorder %s15, 6
      %s25 = sphi 0, %s27
      %s28 = sphi 0, %s25
      %s29 = sphi 0, %s28
      %s45 = sphi 0, %s29
      %s49 = sphi 0, %s49
      %s51 = sphi 0, %s49
      %s52 = sphi 0, %s51
      %s66 = sphi 0, %s52
      %s70 = sphi 0, %s70
      %s72 = sphi 0, %s70
      %s73 = sphi 0, %s72
      %s87 = sphi 0, %s73
      %s91 = sphi 0, %s91
      %s93 = sphi 0, %s91
      %s94 = sphi 0, %s93
      %s108 = sphi 0, %s94
      %s112 = sphi 0, %s112
      %s114 = sphi 0, %s112
      %s115 = sphi 0, %s114
      %s129 = sphi 0, %s115
      %s133 = sphi 0, %s133
      %s135 = sphi 0, %s133
      %s136 = sphi 0, %s135
      %s150 = sphi 0, %s136
      %s156 = sphi 0, %s158
      %s159 = sphi 0, %s156
      %s160 = sphi 0, %s159
      %s176 = sphi 0, %s160
    $region4: #{res_stack_forward.5} parent=1 // loop_header_branch
      %18 = sbr.rel (%p16) target = $region8
    $region5: #{res_stack_forward.5} parent=1 // loop_body
      %s20 = ssub.s32 %s15, 1
      %s21 = ssub.s32 %s15, 2
      %s22 = sadd.s32 %s15, 1
      %s23 = ssub.s32 %s15, %s22
      %p24 = scmp.eq.s32.totalorder %s23, 0
      %s26 = sadd.s32 %s25, 1
      %s27 = scalar_select %p24, %s25, %s26
      %p30 = pneg %p24
      %p31 = scmp.eq.s32.totalorder %s15, 3
      %p32 = por %p30, %p31
      %p33 = scmp.ne.s32.totalorder %s25, %s28
      %p34 = scmp.eq.s32.totalorder %s15, 0
      %p35 = por %p33, %p34
      %p36 = scmp.ne.s32.totalorder %s25, %s28
      %p37 = scmp.eq.s32.totalorder %s20, 3
      %p38 = por %p36, %p37
      %p39 = scmp.ne.s32.totalorder %s28, %s29
      %p40 = scmp.eq.s32.totalorder %s20, 0
      %p41 = por %p39, %p40
      %p42 = scmp.ne.s32.totalorder %s28, %s29
      %p43 = scmp.eq.s32.totalorder %s21, 3
      %p44 = por %p42, %p43
      %p46 = scmp.ne.s32.totalorder %s29, %s45
      %p47 = scmp.eq.s32.totalorder %s21, 0
      %p48 = por %p46, %p47
      %s50 = sadd.s32 %s49, 1
      %p53 = scmp.eq.s32.totalorder %s15, 3
      %p54 = scmp.ne.s32.totalorder %s49, %s51
      %p55 = scmp.eq.s32.totalorder %s15, 0
      %p56 = por %p54, %p55
      %p57 = scmp.ne.s32.totalorder %s49, %s51
      %p58 = scmp.eq.s32.totalorder %s20, 3
      %p59 = por %p57, %p58
      %p60 = scmp.ne.s32.totalorder %s51, %s52
      %p61 = scmp.eq.s32.totalorder %s20, 0
      %p62 = por %p60, %p61
      %p63 = scmp.ne.s32.totalorder %s51, %s52
      %p64 = scmp.eq.s32.totalorder %s21, 3
      %p65 = por %p63, %p64
      %p67 = scmp.ne.s32.totalorder %s52, %s66
      %p68 = scmp.eq.s32.totalorder %s21, 0
      %p69 = por %p67, %p68
      %s71 = sadd.s32 %s70, 1
      %p74 = scmp.eq.s32.totalorder %s15, 3
      %p75 = scmp.ne.s32.totalorder %s70, %s72
      %p76 = scmp.eq.s32.totalorder %s15, 0
      %p77 = por %p75, %p76
      %p78 = scmp.ne.s32.totalorder %s70, %s72
      %p79 = scmp.eq.s32.totalorder %s20, 3
      %p80 = por %p78, %p79
      %p81 = scmp.ne.s32.totalorder %s72, %s73
      %p82 = scmp.eq.s32.totalorder %s20, 0
      %p83 = por %p81, %p82
      %p84 = scmp.ne.s32.totalorder %s72, %s73
      %p85 = scmp.eq.s32.totalorder %s21, 3
      %p86 = por %p84, %p85
      %p88 = scmp.ne.s32.totalorder %s73, %s87
      %p89 = scmp.eq.s32.totalorder %s21, 0
      %p90 = por %p88, %p89
      %s92 = sadd.s32 %s91, 1
      %p95 = scmp.eq.s32.totalorder %s15, 3
      %p96 = scmp.ne.s32.totalorder %s91, %s93
      %p97 = scmp.eq.s32.totalorder %s15, 0
      %p98 = por %p96, %p97
      %p99 = scmp.ne.s32.totalorder %s91, %s93
      %p100 = scmp.eq.s32.totalorder %s20, 3
      %p101 = por %p99, %p100
      %p102 = scmp.ne.s32.totalorder %s93, %s94
      %p103 = scmp.eq.s32.totalorder %s20, 0
      %p104 = por %p102, %p103
      %p105 = scmp.ne.s32.totalorder %s93, %s94
      %p106 = scmp.eq.s32.totalorder %s21, 3
      %p107 = por %p105, %p106
      %p109 = scmp.ne.s32.totalorder %s94, %s108
      %p110 = scmp.eq.s32.totalorder %s21, 0
      %p111 = por %p109, %p110
      %s113 = sadd.s32 %s112, 1
      %p116 = scmp.eq.s32.totalorder %s15, 3
      %p117 = scmp.ne.s32.totalorder %s112, %s114
      %p118 = scmp.eq.s32.totalorder %s15, 0
      %p119 = por %p117, %p118
      %p120 = scmp.ne.s32.totalorder %s112, %s114
      %p121 = scmp.eq.s32.totalorder %s20, 3
      %p122 = por %p120, %p121
      %p123 = scmp.ne.s32.totalorder %s114, %s115
      %p124 = scmp.eq.s32.totalorder %s20, 0
      %p125 = por %p123, %p124
      %p126 = scmp.ne.s32.totalorder %s114, %s115
      %p127 = scmp.eq.s32.totalorder %s21, 3
      %p128 = por %p126, %p127
      %p130 = scmp.ne.s32.totalorder %s115, %s129
      %p131 = scmp.eq.s32.totalorder %s21, 0
      %p132 = por %p130, %p131
      %s134 = sadd.s32 %s133, 1
      %p137 = scmp.eq.s32.totalorder %s15, 3
      %p138 = scmp.ne.s32.totalorder %s133, %s135
      %p139 = scmp.eq.s32.totalorder %s15, 0
      %p140 = por %p138, %p139
      %p141 = scmp.ne.s32.totalorder %s133, %s135
      %p142 = scmp.eq.s32.totalorder %s20, 3
      %p143 = por %p141, %p142
      %p144 = scmp.ne.s32.totalorder %s135, %s136
      %p145 = scmp.eq.s32.totalorder %s20, 0
      %p146 = por %p144, %p145
      %p147 = scmp.ne.s32.totalorder %s135, %s136
      %p148 = scmp.eq.s32.totalorder %s21, 3
      %p149 = por %p147, %p148
      %p151 = scmp.ne.s32.totalorder %s136, %s150
      %p152 = scmp.eq.s32.totalorder %s21, 0
      %p153 = por %p151, %p152
      %s154 = ssub.s32 %s15, %s22
      %p155 = scmp.eq.s32.totalorder %s154, 0
      %s157 = sadd.s32 %s156, 1
      %s158 = scalar_select %p155, %s156, %s157
      %p161 = pneg %p155
      %p162 = scmp.eq.s32.totalorder %s15, 3
      %p163 = por %p161, %p162
      %p164 = scmp.ne.s32.totalorder %s156, %s159
      %p165 = scmp.eq.s32.totalorder %s15, 0
      %p166 = por %p164, %p165
      %p167 = scmp.ne.s32.totalorder %s156, %s159
      %p168 = scmp.eq.s32.totalorder %s20, 3
      %p169 = por %p167, %p168
      %p170 = scmp.ne.s32.totalorder %s159, %s160
      %p171 = scmp.eq.s32.totalorder %s20, 0
      %p172 = por %p170, %p171
      %p173 = scmp.ne.s32.totalorder %s159, %s160
      %p174 = scmp.eq.s32.totalorder %s21, 3
      %p175 = por %p173, %p174
      %p177 = scmp.ne.s32.totalorder %s160, %s176
      %p178 = scmp.eq.s32.totalorder %s21, 0
      %p179 = por %p177, %p178
      %p180 = scmp.le.s32.totalorder 1, %s15
      %p181 = scmp.lt.s32.totalorder %s15, 5
      %p182 = pnand %p180, %p181
      %p183 = pneg %p182
      // Predicated region
      $region9: #{res_stack_forward.5} parent=5 // pred_check
        _
      $region10: #{res_stack_forward.5} parent=5 // pred_check_branch
        %185 = sbr.rel (%p182) target = $region12
      $region11: #{res_stack_forward.5} parent=5 // pred_region
        %s186 = ssub.s32 %s15, 1
        // Predicated region
        $region13: #{res_stack_forward.5} parent=11 // pred_check
          %p187 = pneg %p62
        $region14: #{res_stack_forward.5} parent=11 // pred_check_branch
          %189 = sbr.rel (%p187) target = $region16
        $region15: #{res_stack_forward.5} parent=11 // pred_region
          _
        $region16: #{res_stack_forward.5} parent=11 // pred_fallthru
          _
        // Predicated region
        $region17: #{res_stack_forward.5} parent=11 // pred_check
          %p190 = pneg %p83
        $region18: #{res_stack_forward.5} parent=11 // pred_check_branch
          %192 = sbr.rel (%p190) target = $region20
        $region19: #{res_stack_forward.5} parent=11 // pred_region
          _
        $region20: #{res_stack_forward.5} parent=11 // pred_fallthru
          _
        // Predicated region
        $region21: #{res_stack_forward.5} parent=11 // pred_check
          %p193 = pneg %p104
        $region22: #{res_stack_forward.5} parent=11 // pred_check_branch
          %195 = sbr.rel (%p193) target = $region24
        $region23: #{res_stack_forward.5} parent=11 // pred_region
          _
        $region24: #{res_stack_forward.5} parent=11 // pred_fallthru
          _
        // Predicated region
        $region25: #{res_stack_forward.5} parent=11 // pred_check
          %p196 = pneg %p125
        $region26: #{res_stack_forward.5} parent=11 // pred_check_branch
          %198 = sbr.rel (%p196) target = $region28
        $region27: #{res_stack_forward.5} parent=11 // pred_region
          _
        $region28: #{res_stack_forward.5} parent=11 // pred_fallthru
          _
        // Predicated region
        $region29: #{res_stack_forward.5} parent=11 // pred_check
          %p199 = pneg %p146
        $region30: #{res_stack_forward.5} parent=11 // pred_check_branch
          %201 = sbr.rel (%p199) target = $region32
        $region31: #{res_stack_forward.5} parent=11 // pred_region
          _
        $region32: #{res_stack_forward.5} parent=11 // pred_fallthru
          _
      $region12: #{res_stack_forward.5} parent=5 // pred_fallthru
        _
      %p202 = scmp.lt.s32.totalorder %s15, 4
      // Predicated region
      $region33: #{res_stack_forward.5} parent=5 // pred_check
        %p203 = pneg %p202
      $region34: #{res_stack_forward.5} parent=5 // pred_check_branch
        %205 = sbr.rel (%p203) target = $region36
      $region35: #{res_stack_forward.5} parent=5 // pred_region
        // Predicated region
        $region37: #{res_stack_forward.5} parent=35 // pred_check
          %p206 = pneg %p35
        $region38: #{res_stack_forward.5} parent=35 // pred_check_branch
          %208 = sbr.rel (%p206) target = $region40
        $region39: #{res_stack_forward.5} parent=35 // pred_region
          %p209 = scmp.lt.s32.totalorder %s15, 3
          %s210 = scalar_select %p209, %s15, 3
          %s211 = smul.addr %s210, 4
          %s212 = smul.addr %s211, 8
          %s213 = scalar_lea.vmem %s0, %s212
        $region40: #{res_stack_forward.5} parent=35 // pred_fallthru
          _
      $region36: #{res_stack_forward.5} parent=5 // pred_fallthru
        _
      %p214 = scmp.le.s32.totalorder 1, %s15
      %p215 = scmp.lt.s32.totalorder %s15, 5
      %p216 = pnand %p214, %p215
      %p217 = pneg %p216
      // Predicated region
      $region41: #{res_stack_forward.5} parent=5 // pred_check
        _
      $region42: #{res_stack_forward.5} parent=5 // pred_check_branch
        %219 = sbr.rel (%p216) target = $region44
      $region43: #{res_stack_forward.5} parent=5 // pred_region
        %s220 = ssub.s32 %s15, 1
        %p221 = scmp.lt.s32.totalorder %s20, 3
        %s222 = scalar_select %p221, %s20, 3
        %s223 = smul.addr %s222, 4
        %s224 = smul.addr %s223, 8
        %s225 = scalar_lea.vmem %s0, %s224
        %p226 = pneg %p41
        %p227 = pneg %p38
        %p228 = pneg %p62
        %p229 = pneg %p59
        %p230 = pneg %p83
        %p231 = pneg %p80
        %p232 = pneg %p104
        %p233 = pneg %p101
        %p234 = pneg %p125
        %p235 = pneg %p122
        %p236 = pneg %p146
        %p237 = pneg %p143
        %p238 = pneg %p172
        %p239 = pneg %p169
        %s240 = sand.u32 %s159, 1
        %s241 = scalar_lea.sflag [#allocation3], %s240
        %s242 = sand.u32 %s159, 1
        %s243 = smul.addr %s242, 32
        %s244 = scalar_lea.vmem [#allocation2], %s243
        %p245 = scmp.lt.s32.totalorder %s20, 3
        %s246 = scalar_select %p245, %s20, 3
        %s247 = smul.addr %s246, 4
        %s248 = smul.addr %s247, 8
        %s249 = scalar_lea.vmem %s0, %s248
        %v250 = vld [vmem:[%s249] sm:$0xff]
        %v251 = vld [vmem:[%s249 + $0x8] sm:$0xff]
        %v252 = vld [vmem:[%s249 + $0x10] sm:$0xff]
        %v253 = vld [vmem:[%s249 + $0x18] sm:$0xff]
        %v254 = vld [vmem:[%s1] sm:$0xff]
        %v255 = vld [vmem:[%s1 + $0x8] sm:$0xff]
        %v256 = vld [vmem:[%s1 + $0x10] sm:$0xff]
        %v257 = vld [vmem:[%s1 + $0x18] sm:$0xff]
        %v258 = vld [vmem:[%s2] sm:$0xff]
        %v259 = vld [vmem:[%s2 + $0x8] sm:$0xff]
        %v260 = vld [vmem:[%s2 + $0x10] sm:$0xff]
        %v261 = vld [vmem:[%s2 + $0x18] sm:$0xff]
        %v262 = vld [vmem:[%s3] sm:$0xff]
        %v263 = vld [vmem:[%s3 + $0x8] sm:$0xff]
        %v264 = vld [vmem:[%s3 + $0x10] sm:$0xff]
        %v265 = vld [vmem:[%s3 + $0x18] sm:$0xff]
        %v266 = vld [vmem:[%s4] sm:$0xff]
        %v267 = vld [vmem:[%s4 + $0x8] sm:$0xff]
        %v268 = vld [vmem:[%s4 + $0x10] sm:$0xff]
        %v269 = vld [vmem:[%s4 + $0x18] sm:$0xff]
        %271 = vset.pattern.permute.xlu0 0
        %272 = vperm.xlu0 %271, %v254
        %v273 = vpop.permute.xlu0 %272
        %276 = vset.pattern.permute.xlu0 0
        %277 = vperm.xlu0 %276, %v255
        %v278 = vpop.permute.xlu0 %277
        %281 = vset.pattern.permute.xlu0 0
        %282 = vperm.xlu0 %281, %v256
        %v283 = vpop.permute.xlu0 %282
        %286 = vset.pattern.permute.xlu0 0
        %287 = vperm.xlu0 %286, %v257
        %v288 = vpop.permute.xlu0 %287
        %v290 = vmul.f32 %v250, %v273
        %v291 = vmul.f32 %v251, %v278
        %v292 = vmul.f32 %v252, %v283
        %v293 = vmul.f32 %v253, %v288
        %295 = vset.pattern.permute.xlu0 0
        %296 = vperm.xlu0 %295, %v258
        %v297 = vpop.permute.xlu0 %296
        %300 = vset.pattern.permute.xlu0 0
        %301 = vperm.xlu0 %300, %v259
        %v302 = vpop.permute.xlu0 %301
        %305 = vset.pattern.permute.xlu0 0
        %306 = vperm.xlu0 %305, %v260
        %v307 = vpop.permute.xlu0 %306
        %310 = vset.pattern.permute.xlu0 0
        %311 = vperm.xlu0 %310, %v261
        %v312 = vpop.permute.xlu0 %311
        %v314 = vadd.f32 %v290, %v297
        %v315 = vadd.f32 %v291, %v302
        %v316 = vadd.f32 %v292, %v307
        %v317 = vadd.f32 %v293, %v312
        %v318 = vlaneseq
        %v319 = vand.u32 %v318, 127
        %vm320 = vcmp.eq.s32.totalorder %v319, 0
        %321 = vrot.lane.b32.xlu0 %v314, 1
        %v322 = vpop.permute.xlu0 %321
        %323 = vrot.lane.b32.xlu0 %v315, 1
        %v324 = vpop.permute.xlu0 %323
        %325 = vrot.lane.b32.xlu0 %v316, 1
        %v326 = vpop.permute.xlu0 %325
        %327 = vrot.lane.b32.xlu0 %v317, 1
        %v328 = vpop.permute.xlu0 %327
        %v329 = vsel %vm320, 1, 0
        %vm330 = vcmp.eq.s32.totalorder %v329, 1
        %v331 = vsel %vm330, 0.0, %v322
        %v332 = vsel %vm330, 0.0, %v324
        %v333 = vsel %vm330, 0.0, %v326
        %v334 = vsel %vm330, 0.0, %v328
        %vm335 = vcmp.eq.s32.totalorder %v319, 127
        %336 = vrot.lane.b32.xlu0 %v314, 127
        %v337 = vpop.permute.xlu0 %336
        %338 = vrot.lane.b32.xlu0 %v315, 127
        %v339 = vpop.permute.xlu0 %338
        %340 = vrot.lane.b32.xlu0 %v316, 127
        %v341 = vpop.permute.xlu0 %340
        %342 = vrot.lane.b32.xlu0 %v317, 127
        %v343 = vpop.permute.xlu0 %342
        %v344 = vsel %vm335, 1, 0
        %vm345 = vcmp.eq.s32.totalorder %v344, 1
        %v346 = vsel %vm345, 0.0, %v337
        %v347 = vsel %vm345, 0.0, %v339
        %v348 = vsel %vm345, 0.0, %v341
        %v349 = vsel %vm345, 0.0, %v343
        %351 = vset.pattern.permute.xlu0 0
        %352 = vperm.xlu0 %351, %v266
        %v353 = vpop.permute.xlu0 %352
        %356 = vset.pattern.permute.xlu0 0
        %357 = vperm.xlu0 %356, %v267
        %v358 = vpop.permute.xlu0 %357
        %361 = vset.pattern.permute.xlu0 0
        %362 = vperm.xlu0 %361, %v268
        %v363 = vpop.permute.xlu0 %362
        %366 = vset.pattern.permute.xlu0 0
        %367 = vperm.xlu0 %366, %v269
        %v368 = vpop.permute.xlu0 %367
        %vm370 = vcmask 785408
        %v372 = vsel %vm370, %v262, 0
        %v375 = vsel %vm370, %v263, 0
        %v378 = vsel %vm370, %v264, 0
        %v381 = vsel %vm370, %v265, 0
        %383 = vmatprep.subr.mxu0 0.0
        %384 = vmatpush1.msra.mxu0 %v331
        %385 = vmatprep.subr.mxu0 0.0
        %386 = vmatpush1.msra.mxu0 %v332
        %387 = vmatprep.subr.mxu0 0.0
        %388 = vmatpush1.msra.mxu0 %v333
        %389 = vmatprep.subr.mxu0 0.0
        %390 = vmatpush1.msra.mxu0 %v334
        %391 = vmatprep.subr.mxu0 0.0
        %392 = vmatpush1.msra.mxu0 %v314
        %393 = vmatprep.subr.mxu0 0.0
        %394 = vmatpush1.msra.mxu0 %v315
        %395 = vmatprep.subr.mxu0 0.0
        %396 = vmatpush1.msra.mxu0 %v316
        %397 = vmatprep.subr.mxu0 0.0
        %398 = vmatpush1.msra.mxu0 %v317
        %399 = vmatprep.subr.mxu0 0.0
        %400 = vmatpush1.msra.mxu0 %v346
        %401 = vmatprep.subr.mxu0 0.0
        %402 = vmatpush1.msra.mxu0 %v347
        %403 = vmatprep.subr.mxu0 0.0
        %404 = vmatpush1.msra.mxu0 %v348
        %405 = vmatprep.subr.mxu0 0.0
        %406 = vmatpush1.msra.mxu0 %v349
        %407 = vmatprep.subr.mxu0 0.0
        %408 = vmatpush1.msra.mxu0 0.0
        %409 = vmatprep.subr.mxu0 0.0
        %410 = vmatpush1.msra.mxu0 0.0
        %411 = vmatprep.subr.mxu0 0.0
        %412 = vmatpush1.msra.mxu0 0.0
        %413 = vmatprep.subr.mxu0 0.0
        %414 = vmatpush1.msra.mxu0 0.0
        %415 = vmatprep.subr.mxu0 0.0
        %416 = vmatpush1.msra.mxu0 0.0
        %417 = vmatprep.subr.mxu0 0.0
        %418 = vmatpush1.msra.mxu0 0.0
        %419 = vmatprep.subr.mxu0 0.0
        %420 = vmatpush1.msra.mxu0 0.0
        %421 = vmatprep.subr.mxu0 0.0
        %422 = vmatpush1.msra.mxu0 0.0
        %423 = vmatprep.subr.mxu0 0.0
        %424 = vmatpush1.msra.mxu0 0.0
        %425 = vmatprep.subr.mxu0 0.0
        %426 = vmatpush1.msra.mxu0 0.0
        %427 = vmatprep.subr.mxu0 0.0
        %428 = vmatpush1.msra.mxu0 0.0
        %429 = vmatprep.subr.mxu0 0.0
        %430 = vmatpush1.msra.mxu0 0.0
        %431 = vmatprep.subr.mxu0 0.0
        %432 = vmatpush1.msra.mxu0 0.0
        %433 = vmatprep.subr.mxu0 0.0
        %434 = vmatpush1.msra.mxu0 0.0
        %435 = vmatprep.subr.mxu0 0.0
        %436 = vmatpush1.msra.mxu0 0.0
        %437 = vmatprep.subr.mxu0 0.0
        %438 = vmatpush1.msra.mxu0 0.0
        %439 = vmatprep.subr.mxu0 0.0
        %440 = vmatpush1.msra.mxu0 0.0
        %441 = vmatprep.subr.mxu0 0.0
        %442 = vmatpush1.msra.mxu0 0.0
        %443 = vmatprep.subr.mxu0 0.0
        %444 = vmatpush1.msra.mxu0 0.0
        %445 = vmatprep.subr.mxu0 0.0
        %446 = vmatpush1.msra.mxu0 0.0
        %447 = vmatprep.mubr.f32.mxu0 0.0
        %448 = vmatmul.mubr.f32.gmra.mrb[0].mxu0 %v372
        %v449 = vpop.f32.mrb[0].mxu0
        %v450 = vadd.f32 %v353, %v449
        %v451 = vpop.f32.mrb[0].mxu0
        %452 = vmatprep.mubr.f32.mxu0 0.0
        %453 = vmatmul.mubr.f32.gmra.mrb[0].mxu0 %v375
        %v454 = vpop.f32.mrb[0].mxu0
        %v455 = vadd.f32 %v358, %v454
        %v456 = vpop.f32.mrb[0].mxu0
        %457 = vmatprep.mubr.f32.mxu0 0.0
        %458 = vmatmul.mubr.f32.gmra.mrb[0].mxu0 %v378
        %v459 = vpop.f32.mrb[0].mxu0
        %v460 = vadd.f32 %v363, %v459
        %v461 = vpop.f32.mrb[0].mxu0
        %462 = vmatprep.mubr.f32.mxu0 0.0
        %463 = vmatmul.mubr.f32.gmra.mrb[0].mxu0 %v381
        %v464 = vpop.f32.mrb[0].mxu0
        %v465 = vadd.f32 %v368, %v464
        %v466 = vpop.f32.mrb[0].mxu0
        %467 = vdwg.mxu0
        %v468 = vadd.f32 %v450, %v250
        %v469 = vadd.f32 %v455, %v251
        %v470 = vadd.f32 %v460, %v252
        %v471 = vadd.f32 %v465, %v253
        %v472 = vmax.f32 %v468, 0.0
        %v473 = vmax.f32 %v469, 0.0
        %v474 = vmax.f32 %v470, 0.0
        %v475 = vmax.f32 %v471, 0.0
        %476 = vrot.lane.b32.xlu0 %v472, 127
        %v477 = vpop.permute.xlu0 %476
        %478 = vrot.lane.b32.xlu0 %v473, 127
        %v479 = vpop.permute.xlu0 %478
        %480 = vrot.lane.b32.xlu0 %v474, 127
        %v481 = vpop.permute.xlu0 %480
        %482 = vrot.lane.b32.xlu0 %v475, 127
        %v483 = vpop.permute.xlu0 %482
        %v484 = vmax.f32 %v472, %v477
        %v485 = vmax.f32 %v473, %v479
        %v486 = vmax.f32 %v474, %v481
        %v487 = vmax.f32 %v475, %v483
        %v488 = vld [vmem:[%s5] sm:$0xff]
        %v489 = vld [vmem:[%s5 + $0x8] sm:$0xff]
        %v490 = vld [vmem:[%s5 + $0x10] sm:$0xff]
        %v491 = vld [vmem:[%s5 + $0x18] sm:$0xff]
        %v492 = vld [vmem:[%s5 + $0x20] sm:$0xff]
        %v493 = vld [vmem:[%s5 + $0x28] sm:$0xff]
        %v494 = vld [vmem:[%s5 + $0x30] sm:$0xff]
        %v495 = vld [vmem:[%s5 + $0x38] sm:$0xff]
        %v496 = vld [vmem:[%s5 + $0x40] sm:$0xff]
        %v497 = vld [vmem:[%s5 + $0x48] sm:$0xff]
        %v498 = vld [vmem:[%s5 + $0x50] sm:$0xff]
        %v499 = vld [vmem:[%s5 + $0x58] sm:$0xff]
        %v500 = vld [vmem:[%s5 + $0x60] sm:$0xff]
        %v501 = vld [vmem:[%s5 + $0x68] sm:$0xff]
        %v502 = vld [vmem:[%s5 + $0x70] sm:$0xff]
        %v503 = vld [vmem:[%s5 + $0x78] sm:$0xff]
        %504 = vmatprep.subr.mxu0 0.0
        %505 = vmatpush1.msra.mxu0 %v488
        %506 = vmatprep.subr.mxu0 0.0
        %507 = vmatpush1.msra.mxu0 %v489
        %508 = vmatprep.subr.mxu0 0.0
        %509 = vmatpush1.msra.mxu0 %v490
        %510 = vmatprep.subr.mxu0 0.0
        %511 = vmatpush1.msra.mxu0 %v491
        %512 = vmatprep.subr.mxu0 0.0
        %513 = vmatpush1.msra.mxu0 %v492
        %514 = vmatprep.subr.mxu0 0.0
        %515 = vmatpush1.msra.mxu0 %v493
        %516 = vmatprep.subr.mxu0 0.0
        %517 = vmatpush1.msra.mxu0 %v494
        %518 = vmatprep.subr.mxu0 0.0
        %519 = vmatpush1.msra.mxu0 %v495
        %520 = vmatprep.subr.mxu0 0.0
        %521 = vmatpush1.msra.mxu0 %v496
        %522 = vmatprep.subr.mxu0 0.0
        %523 = vmatpush1.msra.mxu0 %v497
        %524 = vmatprep.subr.mxu0 0.0
        %525 = vmatpush1.msra.mxu0 %v498
        %526 = vmatprep.subr.mxu0 0.0
        %527 = vmatpush1.msra.mxu0 %v499
        %528 = vmatprep.subr.mxu0 0.0
        %529 = vmatpush1.msra.mxu0 %v500
        %530 = vmatprep.subr.mxu0 0.0
        %531 = vmatpush1.msra.mxu0 %v501
        %532 = vmatprep.subr.mxu0 0.0
        %533 = vmatpush1.msra.mxu0 %v502
        %534 = vmatprep.subr.mxu0 0.0
        %535 = vmatpush1.msra.mxu0 %v503
        %536 = vmatprep.subr.mxu0 0.0
        %537 = vmatpush1.msra.mxu0 0.0
        %538 = vmatprep.subr.mxu0 0.0
        %539 = vmatpush1.msra.mxu0 0.0
        %540 = vmatprep.subr.mxu0 0.0
        %541 = vmatpush1.msra.mxu0 0.0
        %542 = vmatprep.subr.mxu0 0.0
        %543 = vmatpush1.msra.mxu0 0.0
        %544 = vmatprep.subr.mxu0 0.0
        %545 = vmatpush1.msra.mxu0 0.0
        %546 = vmatprep.subr.mxu0 0.0
        %547 = vmatpush1.msra.mxu0 0.0
        %548 = vmatprep.subr.mxu0 0.0
        %549 = vmatpush1.msra.mxu0 0.0
        %550 = vmatprep.subr.mxu0 0.0
        %551 = vmatpush1.msra.mxu0 0.0
        %552 = vmatprep.subr.mxu0 0.0
        %553 = vmatpush1.msra.mxu0 0.0
        %554 = vmatprep.subr.mxu0 0.0
        %555 = vmatpush1.msra.mxu0 0.0
        %556 = vmatprep.subr.mxu0 0.0
        %557 = vmatpush1.msra.mxu0 0.0
        %558 = vmatprep.subr.mxu0 0.0
        %559 = vmatpush1.msra.mxu0 0.0
        %560 = vmatprep.subr.mxu0 0.0
        %561 = vmatpush1.msra.mxu0 0.0
        %562 = vmatprep.subr.mxu0 0.0
        %563 = vmatpush1.msra.mxu0 0.0
        %564 = vmatprep.subr.mxu0 0.0
        %565 = vmatpush1.msra.mxu0 0.0
        %566 = vmatprep.subr.mxu0 0.0
        %567 = vmatpush1.msra.mxu0 0.0
        %568 = vmatprep.mubr.f32.mxu0 0.0
        %569 = vmatmul.mubr.f32.gmra.mrb[0].mxu0 %v484
        %v570 = vpop.f32.mrb[0].mxu0
        %v571 = vadd.f32 0.0, %v570
        %v572 = vpop.f32.mrb[0].mxu0
        %573 = vmatprep.mubr.f32.mxu0 0.0
        %574 = vmatmul.mubr.f32.gmra.mrb[0].mxu0 %v485
        %v575 = vpop.f32.mrb[0].mxu0
        %v576 = vadd.f32 0.0, %v575
        %v577 = vpop.f32.mrb[0].mxu0
        %578 = vmatprep.mubr.f32.mxu0 0.0
        %579 = vmatmul.mubr.f32.gmra.mrb[0].mxu0 %v486
        %v580 = vpop.f32.mrb[0].mxu0
        %v581 = vadd.f32 0.0, %v580
        %v582 = vpop.f32.mrb[0].mxu0
        %583 = vmatprep.mubr.f32.mxu0 0.0
        %584 = vmatmul.mubr.f32.gmra.mrb[0].mxu0 %v487
        %v585 = vpop.f32.mrb[0].mxu0
        %v586 = vadd.f32 0.0, %v585
        %v587 = vpop.f32.mrb[0].mxu0
        %588 = vdwg.mxu0
        %vm589 = vcmask 523264
        %590 = vst.msk [vmem:[%s244] sm:$0xff] %vm589, %v571
        %591 = vst.msk [vmem:[%s244 + $0x8] sm:$0xff] %vm589, %v576
        %592 = vst.msk [vmem:[%s244 + $0x10] sm:$0xff] %vm589, %v581
        %593 = vst.msk [vmem:[%s244 + $0x18] sm:$0xff] %vm589, %v586
        %s594 = sand.u32 %s159, 1
        %s595 = scalar_lea.sflag [#allocation3], %s594
        %s596 = sand.u32 %s159, 1
        %s597 = smul.addr %s596, 32
        %s598 = scalar_lea.vmem [#allocation2], %s597
        // Predicated region
        $region45: #{res_stack_forward.5} parent=43 // pred_check
          %p599 = pneg %p169
        $region46: #{res_stack_forward.5} parent=43 // pred_check_branch
          %601 = sbr.rel (%p599) target = $region48
        $region47: #{res_stack_forward.5} parent=43 // pred_region
          %s603 = ssub.s32 512, 512
          %604 = vsyncadd %s595, %s603
          %s605 = smul.addr %s20, 4
          %s606 = smul.addr %s605, 128
          %s607 = scalar_lea.hbm %s6, %s606
          %s608 = sshll.u32 %s598, 4
          %s609 = int_to_ptr.vmem [resolvable:$true] %s608
          %614 = dma.vmem_to_hbm [thread:$0]  %s609, 512, %s607, %s595, 128, 128, 8
        $region48: #{res_stack_forward.5} parent=43 // pred_fallthru
          _
      $region44: #{res_stack_forward.5} parent=5 // pred_fallthru
        _
      %p615 = scmp.le.s32.totalorder 2, %s15
      // Predicated region
      $region49: #{res_stack_forward.5} parent=5 // pred_check
        %p616 = pneg %p615
      $region50: #{res_stack_forward.5} parent=5 // pred_check_branch
        %618 = sbr.rel (%p616) target = $region52
      $region51: #{res_stack_forward.5} parent=5 // pred_region
        %s619 = ssub.s32 %s15, 2
        // Predicated region
        $region53: #{res_stack_forward.5} parent=51 // pred_check
          %p620 = pneg %p175
        $region54: #{res_stack_forward.5} parent=51 // pred_check_branch
          %622 = sbr.rel (%p620) target = $region56
        $region55: #{res_stack_forward.5} parent=51 // pred_region
          %s623 = sand.u32 %s160, 1
          %s624 = scalar_lea.sflag [#allocation3], %s623
          %s625 = sand.u32 %s160, 1
          %s626 = smul.addr %s625, 32
          %s627 = scalar_lea.vmem [#allocation2], %s626
          %628 = dma.done %s624, 512
        $region56: #{res_stack_forward.5} parent=51 // pred_fallthru
          _
      $region52: #{res_stack_forward.5} parent=5 // pred_fallthru
        _
    $region6: #{res_stack_forward.5} parent=1 // loop_footer
      %s19 = sadd.s32 1, %s15
    $region7: #{res_stack_forward.5} parent=1 // loop_footer_branch
      %14 = sbr.rel target = $region3
    $region8: #{res_stack_forward.5} parent=1 // loop_exit
      _
    %629 = vsyncpa [#allocation3], 1
    %s630 = scalar_lea.sflag [#allocation3], 1
    %631 = vsyncpa %s630, 1

</llo_original>
